<compile_context>
chip_gen: v5e
topology: v5e:2x2
jax: 0.10.0
libtpu: 0.0.40
codegen_flags: <defaults>
</compile_context>

<pallas_src>
import numpy as np
import jax
import jax.numpy as jnp
from jax.experimental import pallas as pl
from jax.experimental.pallas import tpu as pltpu

# ----------------------------- static sizes --------------------------------
H_IN = 6                      # input spatial size
SP = H_IN + 2                 # conv output spatial size (8)
C1 = 16                       # conv1 out channels
C2 = 32                       # conv2 out channels
HIDDEN = 128                  # linear0/1/2 width
NPIX = H_IN * H_IN            # 36  : raw input pixels per sample
FLAT = C2 * SP * SP           # 2048: flattened conv2 output per sample
B = 16                        # total batch per call
BT = 8                        # batch tile (fills the 8 MXU sublanes)


# ----------------------------- fused kernel --------------------------------
def _fused_forward_kernel(
    x_ref,                  # (BT, 36)     raw pixels, f32
    wconv_ref, b2_ref,      # (36, 2048) bf16, (1, 2048) f32  conv1∘conv2 fold
    wf_ref, bl0_ref,        # (2048, 128) bf16, (1, 128) f32  linear0
    wl1_ref, bl1_ref,       # (128, 128) bf16, (1, 128) f32   linear1
    wl2_ref, bl2_ref,       # (128, 128) bf16, (1, 128) f32   linear2
    wl3_ref, bl3_ref,       # (1, 128) f32, (1, 1) f32        linear3
    o_ref,                  # (BT, 1) f32
):
    f32, bf16 = jnp.float32, jnp.bfloat16

    # conv1 + conv2 (+ all zero padding) as ONE banded MXU matmul on raw pixels.
    xb = x_ref[...].astype(bf16)                                    # (BT, 36)
    v2 = jnp.dot(xb, wconv_ref[...], preferred_element_type=f32)
    v2 = v2 + b2_ref[...]                                           # (BT, 2048)

    # flatten + linear0: lane order already equals torch's NCHW flatten order.
    v4 = jnp.dot(v2.astype(bf16), wf_ref[...],
                 preferred_element_type=f32) + bl0_ref[...]         # (BT, 128)

    # linear1 / linear2: 128x128 MXU matmuls over the whole batch tile.
    v5 = jnp.dot(v4.astype(bf16), wl1_ref[...],
                 preferred_element_type=f32) + bl1_ref[...]
    v6 = jnp.dot(v5.astype(bf16), wl2_ref[...],
                 preferred_element_type=f32) + bl2_ref[...]

    # linear3 (128 -> 1): VPU multiply + lane reduction, then sigmoid (EUP).
    z = jnp.sum(v6 * wl3_ref[...], axis=-1, keepdims=True) + bl3_ref[...]
    o_ref[...] = (1.0 / (1.0 + jnp.exp(-z))).astype(o_ref.dtype)


def fused_forward(x_nchw, fp):
    """x_nchw: (B, 1, 6, 6) float32.  fp: dict from prepare_fused_params."""
    batch = x_nchw.shape[0]
    xflat = x_nchw.reshape(batch, NPIX)        # raw pixels only — no pad/broadcast
    return pl.pallas_call(
        _fused_forward_kernel,
        out_shape=jax.ShapeDtypeStruct((batch, 1), jnp.float32),
        grid_spec=pltpu.PrefetchScalarGridSpec(
            num_scalar_prefetch=0,
            grid=(batch // BT,),
            in_specs=[
                pl.BlockSpec((BT, NPIX), lambda i: (i, 0)),        # x batch tile
                pl.BlockSpec((NPIX, FLAT), lambda i: (0, 0)),      # wconv
                pl.BlockSpec((1, FLAT), lambda i: (0, 0)),         # b2eff
                pl.BlockSpec((FLAT, HIDDEN), lambda i: (0, 0)),    # wf (=wl0.T)
                pl.BlockSpec((1, HIDDEN), lambda i: (0, 0)),       # bl0
                pl.BlockSpec((HIDDEN, HIDDEN), lambda i: (0, 0)),  # wl1t
                pl.BlockSpec((1, HIDDEN), lambda i: (0, 0)),       # bl1
                pl.BlockSpec((HIDDEN, HIDDEN), lambda i: (0, 0)),  # wl2t
                pl.BlockSpec((1, HIDDEN), lambda i: (0, 0)),       # bl2
                pl.BlockSpec((1, HIDDEN), lambda i: (0, 0)),       # wl3
                pl.BlockSpec((1, 1), lambda i: (0, 0)),            # bl3
            ],
            out_specs=pl.BlockSpec((BT, 1), lambda i: (i, 0)),
        ),
        compiler_params=pltpu.CompilerParams(
            dimension_semantics=("parallel",)),   # v7x: shard tiles over 2 TCs
    )(xflat, fp["wconv"], fp["b2eff"], fp["wf"], fp["bl0"],
      fp["wl1t"], fp["bl1"], fp["wl2t"], fp["bl2"], fp["wl3"], fp["bl3"])


# ------------------------ weight preparation (once) -------------------------
def prepare_fused_params(params):
    (w1, b1), (w2, b2), (wl0, bl0), (wl1, bl1), (wl2, bl2), (wl3, bl3) = params
    w1n, b1n = np.asarray(w1), np.asarray(b1)
    w2n, b2n = np.asarray(w2), np.asarray(b2)

    # conv1 folded into conv2: effective 3x3 filter on the raw 1-channel input
    # and b1's contribution routed through conv2's taps.
    w2eff = np.einsum("dckl,c->dkl", w2n, w1n)            # (32, 3, 3)
    wb = np.einsum("dckl,c->dkl", w2n, b1n)               # (32, 3, 3)

    # Banded weight: raw pixel (yi*6+xi) -> flattened conv2 output column in
    # torch NCHW flatten order (d*64 + yo*8 + xo).  Both paddings are implicit
    # in which taps fall inside the image; the conv1 bias is edge-aware.
    wconv = np.zeros((NPIX, FLAT), np.float32)
    b2eff = np.zeros((C2, SP, SP), np.float32) + b2n[:, None, None]
    for yo in range(SP):
        for xo in range(SP):
            cols = np.arange(C2) * SP * SP + yo * SP + xo
            for ky in range(3):
                for kx in range(3):
                    yi, xi = yo + ky - 2, xo + kx - 2
                    if 0 <= yi < H_IN and 0 <= xi < H_IN:
                        wconv[yi * H_IN + xi, cols] += w2eff[:, ky, kx]
                    # conv1 output (and hence b1) exists wherever the conv2 tap
                    # lands inside the un-padded conv1 grid: 1 <= yo+ky,xo+kx <= 8.
                    if 1 <= yo + ky <= SP and 1 <= xo + kx <= SP:
                        b2eff[:, yo, xo] += wb[:, ky, kx]

    bf16, f32 = jnp.bfloat16, jnp.float32
    return {
        "wconv": jnp.asarray(wconv, bf16),                          # (36, 2048)
        "b2eff": jnp.asarray(b2eff.reshape(1, FLAT), f32),          # (1, 2048)
        "wf":    jnp.asarray(np.asarray(wl0).T, bf16),              # (2048, 128)
        "bl0":   jnp.asarray(np.asarray(bl0)[None, :], f32),
        "wl1t":  jnp.asarray(np.asarray(wl1).T, bf16),
        "bl1":   jnp.asarray(np.asarray(bl1)[None, :], f32),
        "wl2t":  jnp.asarray(np.asarray(wl2).T, bf16),
        "bl2":   jnp.asarray(np.asarray(bl2)[None, :], f32),
        "wl3":   jnp.asarray(np.asarray(wl3).reshape(1, HIDDEN), f32),
        "bl3":   jnp.asarray(np.asarray(bl3).reshape(1, 1), f32),
    }


# ------------------------------ init & reference ----------------------------
def init_params(key):
    ks = jax.random.split(key, 12)

    def rnd(k, shape, fan_in):
        return jax.random.normal(k, shape, jnp.float32) / jnp.sqrt(fan_in)

    w1 = rnd(ks[0], (C1,), 1.0)                      # conv1 (16,1,1,1) squeezed
    b1 = 0.1 * rnd(ks[1], (C1,), 1.0)
    w2 = rnd(ks[2], (C2, C1, 3, 3), float(C1 * 9))   # conv2 (out, in, kh, kw)
    b2 = 0.1 * rnd(ks[3], (C2,), 1.0)
    wl0 = rnd(ks[4], (HIDDEN, FLAT), float(FLAT))    # torch Linear: (out, in)
    bl0 = 0.1 * rnd(ks[5], (HIDDEN,), 1.0)
    wl1 = rnd(ks[6], (HIDDEN, HIDDEN), float(HIDDEN))
    bl1 = 0.1 * rnd(ks[7], (HIDDEN,), 1.0)
    wl2 = rnd(ks[8], (HIDDEN, HIDDEN), float(HIDDEN))
    bl2 = 0.1 * rnd(ks[9], (HIDDEN,), 1.0)
    wl3 = rnd(ks[10], (1, HIDDEN), float(HIDDEN))
    bl3 = 0.1 * rnd(ks[11], (1,), 1.0)
    return ((w1, b1), (w2, b2), (wl0, bl0), (wl1, bl1), (wl2, bl2), (wl3, bl3))


def reference_forward(x, params):
    """Plain-JAX batched reference with torch semantics (high-precision dots)."""
    (w1, b1), (w2, b2), (wl0, bl0), (wl1, bl1), (wl2, bl2), (wl3, bl3) = params
    hi = jax.lax.Precision.HIGHEST
    batch = x.shape[0]
    xpad1 = jnp.pad(x[:, 0], ((0, 0), (1, 1), (1, 1)))                 # (B,8,8)
    v1 = (w1[None, :, None, None] * xpad1[:, None, :, :]
          + b1[None, :, None, None])                                   # (B,16,8,8)
    v1p = jnp.pad(v1, ((0, 0), (0, 0), (1, 1), (1, 1)))                # (B,16,10,10)
    v2 = jnp.broadcast_to(b2[None, :, None, None], (batch, C2, SP, SP))
    for ky in range(3):
        for kx in range(3):
            v2 = v2 + jnp.einsum("dc,bcij->bdij", w2[:, :, ky, kx],
                                 v1p[:, :, ky:ky + SP, kx:kx + SP], precision=hi)
    v3 = v2.reshape(batch, -1)                                         # (B, 2048)
    v4 = jnp.dot(v3, wl0.T, precision=hi) + bl0
    v5 = jnp.dot(v4, wl1.T, precision=hi) + bl1
    v6 = jnp.dot(v5, wl2.T, precision=hi) + bl2
    return jax.nn.sigmoid(jnp.dot(v6, wl3.T, precision=hi) + bl3)


# ----------------------------------- main ------------------------------------
if __name__ == "__main__":
    key = jax.random.PRNGKey(0)
    k_x, k_p = jax.random.split(key)
    x = jax.random.normal(k_x, (B, 1, H_IN, H_IN), jnp.float32)
    params = init_params(k_p)
    fused_params = prepare_fused_params(params)   # one-time weight folding

    fwd = jax.jit(fused_forward)
    out = fwd(x, fused_params)
    jax.block_until_ready(out)

    ref = reference_forward(x, params)
    assert out.shape == (B, 1), out.shape
    assert bool(jnp.isfinite(out).all())
    assert bool(jnp.allclose(out, ref, atol=2e-2, rtol=2e-2)), (out, ref)
    print("KERNEL_OK")
</pallas_src>

<mosaic_0001>
module attributes {stable_mosaic.version = 11 : i64} {
  func.func @_fused_forward_kernel(%arg0: i32, %arg1: memref<8x36xf32, #tpu.memory_space<vmem>>, %arg2: memref<36x2048xbf16, #tpu.memory_space<vmem>>, %arg3: memref<1x2048xf32, #tpu.memory_space<vmem>>, %arg4: memref<2048x128xbf16, #tpu.memory_space<vmem>>, %arg5: memref<1x128xf32, #tpu.memory_space<vmem>>, %arg6: memref<128x128xbf16, #tpu.memory_space<vmem>>, %arg7: memref<1x128xf32, #tpu.memory_space<vmem>>, %arg8: memref<128x128xbf16, #tpu.memory_space<vmem>>, %arg9: memref<1x128xf32, #tpu.memory_space<vmem>>, %arg10: memref<1x128xf32, #tpu.memory_space<vmem>>, %arg11: memref<1x1xf32, #tpu.memory_space<vmem>>, %arg12: memref<8x1xf32, #tpu.memory_space<vmem>>) attributes {dimension_semantics = [#tpu.dimension_semantics<parallel>], iteration_bounds = array<i64: 2>, scalar_prefetch = 0 : i64, scratch_operands = 0 : i64, tpu.core_type = #tpu.core_type<tc>, window_params = [{transform_indices = @transform_0, window_bounds = array<i64: 8, 36>}, {pipeline_mode = #tpu.pipeline_mode<synchronous>, transform_indices = @transform_1, window_bounds = array<i64: 36, 2048>}, {pipeline_mode = #tpu.pipeline_mode<synchronous>, transform_indices = @transform_2, window_bounds = array<i64: 1, 2048>}, {pipeline_mode = #tpu.pipeline_mode<synchronous>, transform_indices = @transform_3, window_bounds = array<i64: 2048, 128>}, {pipeline_mode = #tpu.pipeline_mode<synchronous>, transform_indices = @transform_4, window_bounds = array<i64: 1, 128>}, {pipeline_mode = #tpu.pipeline_mode<synchronous>, transform_indices = @transform_5, window_bounds = array<i64: 128, 128>}, {pipeline_mode = #tpu.pipeline_mode<synchronous>, transform_indices = @transform_6, window_bounds = array<i64: 1, 128>}, {pipeline_mode = #tpu.pipeline_mode<synchronous>, transform_indices = @transform_7, window_bounds = array<i64: 128, 128>}, {pipeline_mode = #tpu.pipeline_mode<synchronous>, transform_indices = @transform_8, window_bounds = array<i64: 1, 128>}, {pipeline_mode = #tpu.pipeline_mode<synchronous>, transform_indices = @transform_9, window_bounds = array<i64: 1, 128>}, {pipeline_mode = #tpu.pipeline_mode<synchronous>, transform_indices = @transform_10, window_bounds = array<i64: 1, 1>}, {transform_indices = @transform_11, window_bounds = array<i64: 8, 1>}]} {
    %c0 = arith.constant 0 : index
    %c0_0 = arith.constant 0 : index
    %0 = vector.load %arg1[%c0, %c0_0] : memref<8x36xf32, #tpu.memory_space<vmem>>, vector<8x36xf32>
    %1 = arith.truncf %0 : vector<8x36xf32> to vector<8x36xbf16>
    %c0_1 = arith.constant 0 : index
    %c0_2 = arith.constant 0 : index
    %2 = vector.load %arg2[%c0_1, %c0_2] : memref<36x2048xbf16, #tpu.memory_space<vmem>>, vector<36x2048xbf16>
    %cst = arith.constant dense<0.000000e+00> : vector<8x2048xf32>
    %3 = tpu.matmul %1, %2, %cst {dimension_numbers = #tpu.dot_dimension_numbers<[1], [0], [0], [1], [0, 0, 1, 1], [], []>} : vector<8x36xbf16>, vector<36x2048xbf16>, vector<8x2048xf32> -> vector<8x2048xf32>
    %c0_3 = arith.constant 0 : index
    %c0_4 = arith.constant 0 : index
    %4 = vector.load %arg3[%c0_3, %c0_4] : memref<1x2048xf32, #tpu.memory_space<vmem>>, vector<1x2048xf32>
    %5 = vector.broadcast %4 : vector<1x2048xf32> to vector<8x2048xf32>
    %6 = arith.addf %3, %5 : vector<8x2048xf32>
    %7 = arith.truncf %6 : vector<8x2048xf32> to vector<8x2048xbf16>
    %c0_5 = arith.constant 0 : index
    %c0_6 = arith.constant 0 : index
    %8 = vector.load %arg4[%c0_5, %c0_6] : memref<2048x128xbf16, #tpu.memory_space<vmem>>, vector<2048x128xbf16>
    %cst_7 = arith.constant dense<0.000000e+00> : vector<8x128xf32>
    %9 = tpu.matmul %7, %8, %cst_7 {dimension_numbers = #tpu.dot_dimension_numbers<[1], [0], [0], [1], [0, 0, 1, 1], [], []>} : vector<8x2048xbf16>, vector<2048x128xbf16>, vector<8x128xf32> -> vector<8x128xf32>
    %c0_8 = arith.constant 0 : index
    %c0_9 = arith.constant 0 : index
    %10 = vector.load %arg5[%c0_8, %c0_9] : memref<1x128xf32, #tpu.memory_space<vmem>>, vector<1x128xf32>
    %11 = vector.broadcast %10 : vector<1x128xf32> to vector<8x128xf32>
    %12 = arith.addf %9, %11 : vector<8x128xf32>
    %13 = arith.truncf %12 : vector<8x128xf32> to vector<8x128xbf16>
    %c0_10 = arith.constant 0 : index
    %c0_11 = arith.constant 0 : index
    %14 = vector.load %arg6[%c0_10, %c0_11] : memref<128x128xbf16, #tpu.memory_space<vmem>>, vector<128x128xbf16>
    %cst_12 = arith.constant dense<0.000000e+00> : vector<8x128xf32>
    %15 = tpu.matmul %13, %14, %cst_12 {dimension_numbers = #tpu.dot_dimension_numbers<[1], [0], [0], [1], [0, 0, 1, 1], [], []>} : vector<8x128xbf16>, vector<128x128xbf16>, vector<8x128xf32> -> vector<8x128xf32>
    %c0_13 = arith.constant 0 : index
    %c0_14 = arith.constant 0 : index
    %16 = vector.load %arg7[%c0_13, %c0_14] : memref<1x128xf32, #tpu.memory_space<vmem>>, vector<1x128xf32>
    %17 = vector.broadcast %16 : vector<1x128xf32> to vector<8x128xf32>
    %18 = arith.addf %15, %17 : vector<8x128xf32>
    %19 = arith.truncf %18 : vector<8x128xf32> to vector<8x128xbf16>
    %c0_15 = arith.constant 0 : index
    %c0_16 = arith.constant 0 : index
    %20 = vector.load %arg8[%c0_15, %c0_16] : memref<128x128xbf16, #tpu.memory_space<vmem>>, vector<128x128xbf16>
    %cst_17 = arith.constant dense<0.000000e+00> : vector<8x128xf32>
    %21 = tpu.matmul %19, %20, %cst_17 {dimension_numbers = #tpu.dot_dimension_numbers<[1], [0], [0], [1], [0, 0, 1, 1], [], []>} : vector<8x128xbf16>, vector<128x128xbf16>, vector<8x128xf32> -> vector<8x128xf32>
    %c0_18 = arith.constant 0 : index
    %c0_19 = arith.constant 0 : index
    %22 = vector.load %arg9[%c0_18, %c0_19] : memref<1x128xf32, #tpu.memory_space<vmem>>, vector<1x128xf32>
    %23 = vector.broadcast %22 : vector<1x128xf32> to vector<8x128xf32>
    %24 = arith.addf %21, %23 : vector<8x128xf32>
    %c0_20 = arith.constant 0 : index
    %c0_21 = arith.constant 0 : index
    %25 = vector.load %arg10[%c0_20, %c0_21] : memref<1x128xf32, #tpu.memory_space<vmem>>, vector<1x128xf32>
    %26 = vector.broadcast %25 : vector<1x128xf32> to vector<8x128xf32>
    %27 = arith.mulf %24, %26 : vector<8x128xf32>
    %cst_22 = arith.constant dense<0.000000e+00> : vector<8xf32>
    %28 = vector.multi_reduction <add>, %27, %cst_22 [1] : vector<8x128xf32> to vector<8xf32>
    %29 = vector.shape_cast %28 : vector<8xf32> to vector<8x1xf32>
    %c0_23 = arith.constant 0 : index
    %c0_24 = arith.constant 0 : index
    %30 = vector.load %arg11[%c0_23, %c0_24] : memref<1x1xf32, #tpu.memory_space<vmem>>, vector<1x1xf32>
    %31 = vector.broadcast %30 : vector<1x1xf32> to vector<8x1xf32>
    %32 = arith.addf %29, %31 : vector<8x1xf32>
    %cst_25 = arith.constant 0.000000e+00 : f32
    %33 = vector.broadcast %cst_25 : f32 to vector<8x1xf32>
    %34 = arith.subf %33, %32 : vector<8x1xf32>
    %35 = math.exp %34 : vector<8x1xf32>
    %cst_26 = arith.constant 1.000000e+00 : f32
    %36 = vector.broadcast %cst_26 : f32 to vector<8x1xf32>
    %37 = arith.addf %36, %35 : vector<8x1xf32>
    %cst_27 = arith.constant 1.000000e+00 : f32
    %38 = vector.broadcast %cst_27 : f32 to vector<8x1xf32>
    %39 = arith.divf %38, %37 : vector<8x1xf32>
    %c0_28 = arith.constant 0 : index
    %c0_29 = arith.constant 0 : index
    %40 = vector.load %arg12[%c0_28, %c0_29] : memref<8x1xf32, #tpu.memory_space<vmem>>, vector<8x1xf32>
    tpu.vector_store %arg12[%c0_28, %c0_29], %39 {strides = array<i32>} : memref<8x1xf32, #tpu.memory_space<vmem>>, vector<8x1xf32>,
    return
  }
  func.func @transform_0(%arg0: i32) -> (i32, i32) {
    %c0_i32 = arith.constant 0 : i32
    %c0_i32_0 = arith.constant 0 : i32
    return %arg0, %c0_i32 : i32, i32
  }
  func.func @transform_1(%arg0: i32) -> (i32, i32) {
    %c0_i32 = arith.constant 0 : i32
    %c0_i32_0 = arith.constant 0 : i32
    %c0_i32_1 = arith.constant 0 : i32
    return %c0_i32, %c0_i32_0 : i32, i32
  }
  func.func @transform_2(%arg0: i32) -> (i32, i32) {
    %c0_i32 = arith.constant 0 : i32
    %c0_i32_0 = arith.constant 0 : i32
    %c0_i32_1 = arith.constant 0 : i32
    return %c0_i32, %c0_i32_0 : i32, i32
  }
  func.func @transform_3(%arg0: i32) -> (i32, i32) {
    %c0_i32 = arith.constant 0 : i32
    %c0_i32_0 = arith.constant 0 : i32
    %c0_i32_1 = arith.constant 0 : i32
    return %c0_i32, %c0_i32_0 : i32, i32
  }
  func.func @transform_4(%arg0: i32) -> (i32, i32) {
    %c0_i32 = arith.constant 0 : i32
    %c0_i32_0 = arith.constant 0 : i32
    %c0_i32_1 = arith.constant 0 : i32
    return %c0_i32, %c0_i32_0 : i32, i32
  }
  func.func @transform_5(%arg0: i32) -> (i32, i32) {
    %c0_i32 = arith.constant 0 : i32
    %c0_i32_0 = arith.constant 0 : i32
    %c0_i32_1 = arith.constant 0 : i32
    return %c0_i32, %c0_i32_0 : i32, i32
  }
  func.func @transform_6(%arg0: i32) -> (i32, i32) {
    %c0_i32 = arith.constant 0 : i32
    %c0_i32_0 = arith.constant 0 : i32
    %c0_i32_1 = arith.constant 0 : i32
    return %c0_i32, %c0_i32_0 : i32, i32
  }
  func.func @transform_7(%arg0: i32) -> (i32, i32) {
    %c0_i32 = arith.constant 0 : i32
    %c0_i32_0 = arith.constant 0 : i32
    %c0_i32_1 = arith.constant 0 : i32
    return %c0_i32, %c0_i32_0 : i32, i32
  }
  func.func @transform_8(%arg0: i32) -> (i32, i32) {
    %c0_i32 = arith.constant 0 : i32
    %c0_i32_0 = arith.constant 0 : i32
    %c0_i32_1 = arith.constant 0 : i32
    return %c0_i32, %c0_i32_0 : i32, i32
  }
  func.func @transform_9(%arg0: i32) -> (i32, i32) {
    %c0_i32 = arith.constant 0 : i32
    %c0_i32_0 = arith.constant 0 : i32
    %c0_i32_1 = arith.constant 0 : i32
    return %c0_i32, %c0_i32_0 : i32, i32
  }
  func.func @transform_10(%arg0: i32) -> (i32, i32) {
    %c0_i32 = arith.constant 0 : i32
    %c0_i32_0 = arith.constant 0 : i32
    %c0_i32_1 = arith.constant 0 : i32
    return %c0_i32, %c0_i32_0 : i32, i32
  }
  func.func @transform_11(%arg0: i32) -> (i32, i32) {
    %c0_i32 = arith.constant 0 : i32
    %c0_i32_0 = arith.constant 0 : i32
    return %arg0, %c0_i32 : i32, i32
  }
}

</mosaic_0001>

<llo_original>
// kernel: fused_forward.1
$region0: #{fused_forward.1}
  #allocation0 [shape = 'u32[]', space=smem, size = 0x4, offset = 0x4, fixed_abs, tag = 'smem constant byte address 0x4 - core index']
  #allocation1 [shape = 'u32[72,128]{1,0:T(1,128)}', space=vmem, size = 0x9000, scoped, tag = 'internal scratch']
  #allocation2 [shape = 'f32[1,1]{1,0:T(1,128)S(1)}', space=vmem, size = 0x200, scoped, tag = 'scoped memory for fused_forward.1']
  %s0 = inlined_call_operand.vmem [shape: f32[16,36], index: 0, kind: input, shape index: {}]
  %s1 = inlined_call_operand.hbm [shape: bf16[36,2048], index: 1, kind: input, shape index: {}]
  %s2 = inlined_call_operand.vmem [shape: f32[1,2048], index: 2, kind: input, shape index: {}]
  %s3 = inlined_call_operand.hbm [shape: bf16[2048,128], index: 3, kind: input, shape index: {}]
  %s4 = inlined_call_operand.vmem [shape: f32[1,128], index: 4, kind: input, shape index: {}]
  %s5 = inlined_call_operand.vmem [shape: bf16[128,128], index: 5, kind: input, shape index: {}]
  %s6 = inlined_call_operand.vmem [shape: f32[1,128], index: 6, kind: input, shape index: {}]
  %s7 = inlined_call_operand.vmem [shape: bf16[128,128], index: 7, kind: input, shape index: {}]
  %s8 = inlined_call_operand.vmem [shape: f32[1,128], index: 8, kind: input, shape index: {}]
  %s9 = inlined_call_operand.vmem [shape: f32[1,128], index: 9, kind: input, shape index: {}]
  %s10 = inlined_call_operand.<no memory space> [shape: f32[1,1], index: 10, kind: input, shape index: {}]
  %s11 = inlined_call_operand.vmem [shape: f32[16,1], index: 11, kind: output, shape index: {}]
  %s12 = sld [smem:[#allocation0]]
  $region85: #{fused_forward.1} parent=0
    _
  %s14 = ssub.s32 1, %s12
  %s15 = scalar_select 0, %s14, %s12
  %v16 = vstv %s10
  %17 = vst [vmem:[#allocation2] sm:$0x1] %v16
  $region1: #{fused_forward.1} parent=0
    #allocation3 [shape = 'u8[163840]{0}', space=vmem, size = 0x28000, scoped, tag = 'input window, operand 1, single buffered']
    #allocation4 [shape = 's32[2]{0}', space=sflag, size = 0x8, scoped, tag = 'scoped memory for fused_forward.1']
    #allocation5 [shape = 'u8[524288]{0}', space=vmem, size = 0x80000, scoped, tag = 'input window, operand 3, single buffered']
    #allocation6 [shape = 's32[1]{0}', space=sflag, size = 0x4, scoped, tag = 'scoped memory for fused_forward.1']
    %18 = vsyncpa [#allocation4], 0
    %19 = vsyncpa [#allocation6], 0
    loop: start=0, step=1, limit=4
    $region2: #{fused_forward.1} parent=1 // loop_pre_header
      _
    $region3: #{fused_forward.1} parent=1 // loop_header
      %s21 = sphi 0, %s25
      %p22 = scmp.ge.s32.totalorder %s21, 4
      %s31 = sphi 0, %s33
      %s34 = sphi 0, %s31
      %s35 = sphi 0, %s34
      %s51 = sphi 0, %s35
      %s55 = sphi 0, %s55
      %s57 = sphi 0, %s55
      %s58 = sphi 0, %s57
      %s72 = sphi 0, %s58
      %s76 = sphi 0, %s76
      %s78 = sphi 0, %s76
      %s79 = sphi 0, %s78
      %s93 = sphi 0, %s79
      %s97 = sphi 0, %s97
      %s99 = sphi 0, %s97
      %s100 = sphi 0, %s99
      %s114 = sphi 0, %s100
      %s118 = sphi 0, %s118
      %s120 = sphi 0, %s118
      %s121 = sphi 0, %s120
      %s135 = sphi 0, %s121
      %s139 = sphi 0, %s139
      %s141 = sphi 0, %s139
      %s142 = sphi 0, %s141
      %s156 = sphi 0, %s142
      %s160 = sphi 0, %s160
      %s162 = sphi 0, %s160
      %s163 = sphi 0, %s162
      %s177 = sphi 0, %s163
      %s181 = sphi 0, %s181
      %s183 = sphi 0, %s181
      %s184 = sphi 0, %s183
      %s198 = sphi 0, %s184
      %s202 = sphi 0, %s202
      %s204 = sphi 0, %s202
      %s205 = sphi 0, %s204
      %s219 = sphi 0, %s205
      %s223 = sphi 0, %s223
      %s225 = sphi 0, %s223
      %s226 = sphi 0, %s225
      %s240 = sphi 0, %s226
      %s244 = sphi 0, %s244
      %s246 = sphi 0, %s244
      %s247 = sphi 0, %s246
      %s261 = sphi 0, %s247
      %s267 = sphi 0, %s269
      %s270 = sphi 0, %s267
      %s271 = sphi 0, %s270
      %s287 = sphi 0, %s271
    $region4: #{fused_forward.1} parent=1 // loop_header_branch
      %24 = sbr.rel (%p22) target = $region8
    $region5: #{fused_forward.1} parent=1 // loop_body
      %s26 = ssub.s32 %s21, 1
      %s27 = ssub.s32 %s21, 2
      %s28 = sadd.s32 %s21, 1
      %s29 = ssub.s32 %s21, %s28
      %p30 = scmp.eq.s32.totalorder %s29, 0
      %s32 = sadd.s32 %s31, 1
      %s33 = scalar_select %p30, %s31, %s32
      %p36 = pneg %p30
      %p37 = scmp.eq.s32.totalorder %s21, 1
      %p38 = por %p36, %p37
      %p39 = scmp.ne.s32.totalorder %s31, %s34
      %p40 = scmp.eq.s32.totalorder %s21, 0
      %p41 = por %p39, %p40
      %p42 = scmp.ne.s32.totalorder %s31, %s34
      %p43 = scmp.eq.s32.totalorder %s26, 1
      %p44 = por %p42, %p43
      %p45 = scmp.ne.s32.totalorder %s34, %s35
      %p46 = scmp.eq.s32.totalorder %s26, 0
      %p47 = por %p45, %p46
      %p48 = scmp.ne.s32.totalorder %s34, %s35
      %p49 = scmp.eq.s32.totalorder %s27, 1
      %p50 = por %p48, %p49
      %p52 = scmp.ne.s32.totalorder %s35, %s51
      %p53 = scmp.eq.s32.totalorder %s27, 0
      %p54 = por %p52, %p53
      %s56 = sadd.s32 %s55, 1
      %p59 = scmp.eq.s32.totalorder %s21, 1
      %p60 = scmp.ne.s32.totalorder %s55, %s57
      %p61 = scmp.eq.s32.totalorder %s21, 0
      %p62 = por %p60, %p61
      %p63 = scmp.ne.s32.totalorder %s55, %s57
      %p64 = scmp.eq.s32.totalorder %s26, 1
      %p65 = por %p63, %p64
      %p66 = scmp.ne.s32.totalorder %s57, %s58
      %p67 = scmp.eq.s32.totalorder %s26, 0
      %p68 = por %p66, %p67
      %p69 = scmp.ne.s32.totalorder %s57, %s58
      %p70 = scmp.eq.s32.totalorder %s27, 1
      %p71 = por %p69, %p70
      %p73 = scmp.ne.s32.totalorder %s58, %s72
      %p74 = scmp.eq.s32.totalorder %s27, 0
      %p75 = por %p73, %p74
      %s77 = sadd.s32 %s76, 1
      %p80 = scmp.eq.s32.totalorder %s21, 1
      %p81 = scmp.ne.s32.totalorder %s76, %s78
      %p82 = scmp.eq.s32.totalorder %s21, 0
      %p83 = por %p81, %p82
      %p84 = scmp.ne.s32.totalorder %s76, %s78
      %p85 = scmp.eq.s32.totalorder %s26, 1
      %p86 = por %p84, %p85
      %p87 = scmp.ne.s32.totalorder %s78, %s79
      %p88 = scmp.eq.s32.totalorder %s26, 0
      %p89 = por %p87, %p88
      %p90 = scmp.ne.s32.totalorder %s78, %s79
      %p91 = scmp.eq.s32.totalorder %s27, 1
      %p92 = por %p90, %p91
      %p94 = scmp.ne.s32.totalorder %s79, %s93
      %p95 = scmp.eq.s32.totalorder %s27, 0
      %p96 = por %p94, %p95
      %s98 = sadd.s32 %s97, 1
      %p101 = scmp.eq.s32.totalorder %s21, 1
      %p102 = scmp.ne.s32.totalorder %s97, %s99
      %p103 = scmp.eq.s32.totalorder %s21, 0
      %p104 = por %p102, %p103
      %p105 = scmp.ne.s32.totalorder %s97, %s99
      %p106 = scmp.eq.s32.totalorder %s26, 1
      %p107 = por %p105, %p106
      %p108 = scmp.ne.s32.totalorder %s99, %s100
      %p109 = scmp.eq.s32.totalorder %s26, 0
      %p110 = por %p108, %p109
      %p111 = scmp.ne.s32.totalorder %s99, %s100
      %p112 = scmp.eq.s32.totalorder %s27, 1
      %p113 = por %p111, %p112
      %p115 = scmp.ne.s32.totalorder %s100, %s114
      %p116 = scmp.eq.s32.totalorder %s27, 0
      %p117 = por %p115, %p116
      %s119 = sadd.s32 %s118, 1
      %p122 = scmp.eq.s32.totalorder %s21, 1
      %p123 = scmp.ne.s32.totalorder %s118, %s120
      %p124 = scmp.eq.s32.totalorder %s21, 0
      %p125 = por %p123, %p124
      %p126 = scmp.ne.s32.totalorder %s118, %s120
      %p127 = scmp.eq.s32.totalorder %s26, 1
      %p128 = por %p126, %p127
      %p129 = scmp.ne.s32.totalorder %s120, %s121
      %p130 = scmp.eq.s32.totalorder %s26, 0
      %p131 = por %p129, %p130
      %p132 = scmp.ne.s32.totalorder %s120, %s121
      %p133 = scmp.eq.s32.totalorder %s27, 1
      %p134 = por %p132, %p133
      %p136 = scmp.ne.s32.totalorder %s121, %s135
      %p137 = scmp.eq.s32.totalorder %s27, 0
      %p138 = por %p136, %p137
      %s140 = sadd.s32 %s139, 1
      %p143 = scmp.eq.s32.totalorder %s21, 1
      %p144 = scmp.ne.s32.totalorder %s139, %s141
      %p145 = scmp.eq.s32.totalorder %s21, 0
      %p146 = por %p144, %p145
      %p147 = scmp.ne.s32.totalorder %s139, %s141
      %p148 = scmp.eq.s32.totalorder %s26, 1
      %p149 = por %p147, %p148
      %p150 = scmp.ne.s32.totalorder %s141, %s142
      %p151 = scmp.eq.s32.totalorder %s26, 0
      %p152 = por %p150, %p151
      %p153 = scmp.ne.s32.totalorder %s141, %s142
      %p154 = scmp.eq.s32.totalorder %s27, 1
      %p155 = por %p153, %p154
      %p157 = scmp.ne.s32.totalorder %s142, %s156
      %p158 = scmp.eq.s32.totalorder %s27, 0
      %p159 = por %p157, %p158
      %s161 = sadd.s32 %s160, 1
      %p164 = scmp.eq.s32.totalorder %s21, 1
      %p165 = scmp.ne.s32.totalorder %s160, %s162
      %p166 = scmp.eq.s32.totalorder %s21, 0
      %p167 = por %p165, %p166
      %p168 = scmp.ne.s32.totalorder %s160, %s162
      %p169 = scmp.eq.s32.totalorder %s26, 1
      %p170 = por %p168, %p169
      %p171 = scmp.ne.s32.totalorder %s162, %s163
      %p172 = scmp.eq.s32.totalorder %s26, 0
      %p173 = por %p171, %p172
      %p174 = scmp.ne.s32.totalorder %s162, %s163
      %p175 = scmp.eq.s32.totalorder %s27, 1
      %p176 = por %p174, %p175
      %p178 = scmp.ne.s32.totalorder %s163, %s177
      %p179 = scmp.eq.s32.totalorder %s27, 0
      %p180 = por %p178, %p179
      %s182 = sadd.s32 %s181, 1
      %p185 = scmp.eq.s32.totalorder %s21, 1
      %p186 = scmp.ne.s32.totalorder %s181, %s183
      %p187 = scmp.eq.s32.totalorder %s21, 0
      %p188 = por %p186, %p187
      %p189 = scmp.ne.s32.totalorder %s181, %s183
      %p190 = scmp.eq.s32.totalorder %s26, 1
      %p191 = por %p189, %p190
      %p192 = scmp.ne.s32.totalorder %s183, %s184
      %p193 = scmp.eq.s32.totalorder %s26, 0
      %p194 = por %p192, %p193
      %p195 = scmp.ne.s32.totalorder %s183, %s184
      %p196 = scmp.eq.s32.totalorder %s27, 1
      %p197 = por %p195, %p196
      %p199 = scmp.ne.s32.totalorder %s184, %s198
      %p200 = scmp.eq.s32.totalorder %s27, 0
      %p201 = por %p199, %p200
      %s203 = sadd.s32 %s202, 1
      %p206 = scmp.eq.s32.totalorder %s21, 1
      %p207 = scmp.ne.s32.totalorder %s202, %s204
      %p208 = scmp.eq.s32.totalorder %s21, 0
      %p209 = por %p207, %p208
      %p210 = scmp.ne.s32.totalorder %s202, %s204
      %p211 = scmp.eq.s32.totalorder %s26, 1
      %p212 = por %p210, %p211
      %p213 = scmp.ne.s32.totalorder %s204, %s205
      %p214 = scmp.eq.s32.totalorder %s26, 0
      %p215 = por %p213, %p214
      %p216 = scmp.ne.s32.totalorder %s204, %s205
      %p217 = scmp.eq.s32.totalorder %s27, 1
      %p218 = por %p216, %p217
      %p220 = scmp.ne.s32.totalorder %s205, %s219
      %p221 = scmp.eq.s32.totalorder %s27, 0
      %p222 = por %p220, %p221
      %s224 = sadd.s32 %s223, 1
      %p227 = scmp.eq.s32.totalorder %s21, 1
      %p228 = scmp.ne.s32.totalorder %s223, %s225
      %p229 = scmp.eq.s32.totalorder %s21, 0
      %p230 = por %p228, %p229
      %p231 = scmp.ne.s32.totalorder %s223, %s225
      %p232 = scmp.eq.s32.totalorder %s26, 1
      %p233 = por %p231, %p232
      %p234 = scmp.ne.s32.totalorder %s225, %s226
      %p235 = scmp.eq.s32.totalorder %s26, 0
      %p236 = por %p234, %p235
      %p237 = scmp.ne.s32.totalorder %s225, %s226
      %p238 = scmp.eq.s32.totalorder %s27, 1
      %p239 = por %p237, %p238
      %p241 = scmp.ne.s32.totalorder %s226, %s240
      %p242 = scmp.eq.s32.totalorder %s27, 0
      %p243 = por %p241, %p242
      %s245 = sadd.s32 %s244, 1
      %p248 = scmp.eq.s32.totalorder %s21, 1
      %p249 = scmp.ne.s32.totalorder %s244, %s246
      %p250 = scmp.eq.s32.totalorder %s21, 0
      %p251 = por %p249, %p250
      %p252 = scmp.ne.s32.totalorder %s244, %s246
      %p253 = scmp.eq.s32.totalorder %s26, 1
      %p254 = por %p252, %p253
      %p255 = scmp.ne.s32.totalorder %s246, %s247
      %p256 = scmp.eq.s32.totalorder %s26, 0
      %p257 = por %p255, %p256
      %p258 = scmp.ne.s32.totalorder %s246, %s247
      %p259 = scmp.eq.s32.totalorder %s27, 1
      %p260 = por %p258, %p259
      %p262 = scmp.ne.s32.totalorder %s247, %s261
      %p263 = scmp.eq.s32.totalorder %s27, 0
      %p264 = por %p262, %p263
      %s265 = ssub.s32 %s21, %s28
      %p266 = scmp.eq.s32.totalorder %s265, 0
      %s268 = sadd.s32 %s267, 1
      %s269 = scalar_select %p266, %s267, %s268
      %p272 = pneg %p266
      %p273 = scmp.eq.s32.totalorder %s21, 1
      %p274 = por %p272, %p273
      %p275 = scmp.ne.s32.totalorder %s267, %s270
      %p276 = scmp.eq.s32.totalorder %s21, 0
      %p277 = por %p275, %p276
      %p278 = scmp.ne.s32.totalorder %s267, %s270
      %p279 = scmp.eq.s32.totalorder %s26, 1
      %p280 = por %p278, %p279
      %p281 = scmp.ne.s32.totalorder %s270, %s271
      %p282 = scmp.eq.s32.totalorder %s26, 0
      %p283 = por %p281, %p282
      %p284 = scmp.ne.s32.totalorder %s270, %s271
      %p285 = scmp.eq.s32.totalorder %s27, 1
      %p286 = por %p284, %p285
      %p288 = scmp.ne.s32.totalorder %s271, %s287
      %p289 = scmp.eq.s32.totalorder %s27, 0
      %p290 = por %p288, %p289
      %p291 = scmp.le.s32.totalorder 1, %s21
      %p292 = scmp.lt.s32.totalorder %s21, 3
      %p293 = pnand %p291, %p292
      %p294 = pneg %p293
      // Predicated region
      $region9: #{fused_forward.1} parent=5 // pred_check
        _
      $region10: #{fused_forward.1} parent=5 // pred_check_branch
        %296 = sbr.rel (%p293) target = $region12
      $region11: #{fused_forward.1} parent=5 // pred_region
        %s297 = ssub.s32 %s21, 1
        // Predicated region
        $region13: #{fused_forward.1} parent=11 // pred_check
          %p298 = pneg %p68
        $region14: #{fused_forward.1} parent=11 // pred_check_branch
          %300 = sbr.rel (%p298) target = $region16
        $region15: #{fused_forward.1} parent=11 // pred_region
          %302 = vsyncadd [#allocation4], 0
          %s303 = sshll.u32 %s1, 4
          %s304 = int_to_ptr.hbm [resolvable:$true] %s303
          %s305 = sshll.u32 [#allocation3], 4
          %s306 = int_to_ptr.vmem [resolvable:$true] %s305
          %311 = dma.hbm_to_vmem [thread:$0]  %s304, 5120, %s306, [#allocation4], 1024, 1024, 64
        $region16: #{fused_forward.1} parent=11 // pred_fallthru
          _
        // Predicated region
        $region17: #{fused_forward.1} parent=11 // pred_check
          %p312 = pneg %p89
        $region18: #{fused_forward.1} parent=11 // pred_check_branch
          %314 = sbr.rel (%p312) target = $region20
        $region19: #{fused_forward.1} parent=11 // pred_region
          _
        $region20: #{fused_forward.1} parent=11 // pred_fallthru
          _
        // Predicated region
        $region21: #{fused_forward.1} parent=11 // pred_check
          %p315 = pneg %p110
        $region22: #{fused_forward.1} parent=11 // pred_check_branch
          %317 = sbr.rel (%p315) target = $region24
        $region23: #{fused_forward.1} parent=11 // pred_region
          %319 = vsyncadd [#allocation6], 0
          %s320 = sshll.u32 %s3, 4
          %s321 = int_to_ptr.hbm [resolvable:$true] %s320
          %s322 = sshll.u32 [#allocation5], 4
          %s323 = int_to_ptr.vmem [resolvable:$true] %s322
          %328 = dma.hbm_to_vmem [thread:$0]  %s321, 16384, %s323, [#allocation6], 64, 64, 4
        $region24: #{fused_forward.1} parent=11 // pred_fallthru
          _
        // Predicated region
        $region25: #{fused_forward.1} parent=11 // pred_check
          %p329 = pneg %p131
        $region26: #{fused_forward.1} parent=11 // pred_check_branch
          %331 = sbr.rel (%p329) target = $region28
        $region27: #{fused_forward.1} parent=11 // pred_region
          _
        $region28: #{fused_forward.1} parent=11 // pred_fallthru
          _
        // Predicated region
        $region29: #{fused_forward.1} parent=11 // pred_check
          %p332 = pneg %p152
        $region30: #{fused_forward.1} parent=11 // pred_check_branch
          %334 = sbr.rel (%p332) target = $region32
        $region31: #{fused_forward.1} parent=11 // pred_region
          _
        $region32: #{fused_forward.1} parent=11 // pred_fallthru
          _
        // Predicated region
        $region33: #{fused_forward.1} parent=11 // pred_check
          %p335 = pneg %p173
        $region34: #{fused_forward.1} parent=11 // pred_check_branch
          %337 = sbr.rel (%p335) target = $region36
        $region35: #{fused_forward.1} parent=11 // pred_region
          _
        $region36: #{fused_forward.1} parent=11 // pred_fallthru
          _
        // Predicated region
        $region37: #{fused_forward.1} parent=11 // pred_check
          %p338 = pneg %p194
        $region38: #{fused_forward.1} parent=11 // pred_check_branch
          %340 = sbr.rel (%p338) target = $region40
        $region39: #{fused_forward.1} parent=11 // pred_region
          _
        $region40: #{fused_forward.1} parent=11 // pred_fallthru
          _
        // Predicated region
        $region41: #{fused_forward.1} parent=11 // pred_check
          %p341 = pneg %p215
        $region42: #{fused_forward.1} parent=11 // pred_check_branch
          %343 = sbr.rel (%p341) target = $region44
        $region43: #{fused_forward.1} parent=11 // pred_region
          _
        $region44: #{fused_forward.1} parent=11 // pred_fallthru
          _
        // Predicated region
        $region45: #{fused_forward.1} parent=11 // pred_check
          %p344 = pneg %p236
        $region46: #{fused_forward.1} parent=11 // pred_check_branch
          %346 = sbr.rel (%p344) target = $region48
        $region47: #{fused_forward.1} parent=11 // pred_region
          _
        $region48: #{fused_forward.1} parent=11 // pred_fallthru
          _
        // Predicated region
        $region49: #{fused_forward.1} parent=11 // pred_check
          %p347 = pneg %p257
        $region50: #{fused_forward.1} parent=11 // pred_check_branch
          %349 = sbr.rel (%p347) target = $region52
        $region51: #{fused_forward.1} parent=11 // pred_region
          _
        $region52: #{fused_forward.1} parent=11 // pred_fallthru
          _
      $region12: #{fused_forward.1} parent=5 // pred_fallthru
        _
      %p350 = scmp.lt.s32.totalorder %s21, 2
      // Predicated region
      $region53: #{fused_forward.1} parent=5 // pred_check
        %p351 = pneg %p350
      $region54: #{fused_forward.1} parent=5 // pred_check_branch
        %353 = sbr.rel (%p351) target = $region56
      $region55: #{fused_forward.1} parent=5 // pred_region
        // Predicated region
        $region57: #{fused_forward.1} parent=55 // pred_check
          %p354 = pneg %p41
        $region58: #{fused_forward.1} parent=55 // pred_check_branch
          %356 = sbr.rel (%p354) target = $region60
        $region59: #{fused_forward.1} parent=55 // pred_region
          %p357 = scmp.lt.s32.totalorder %s21, 1
          %s358 = scalar_select %p357, %s21, 1
          %s359 = smul.addr %s358, 8
          %s360 = scalar_lea.vmem %s0, %s359
        $region60: #{fused_forward.1} parent=55 // pred_fallthru
          _
      $region56: #{fused_forward.1} parent=5 // pred_fallthru
        _
      %p361 = scmp.le.s32.totalorder 1, %s21
      %p362 = scmp.lt.s32.totalorder %s21, 3
      %p363 = pnand %p361, %p362
      %p364 = pneg %p363
      // Predicated region
      $region61: #{fused_forward.1} parent=5 // pred_check
        _
      $region62: #{fused_forward.1} parent=5 // pred_check_branch
        %366 = sbr.rel (%p363) target = $region64
      $region63: #{fused_forward.1} parent=5 // pred_region
        %s367 = ssub.s32 %s21, 1
        // Predicated region
        $region65: #{fused_forward.1} parent=63 // pred_check
          %p368 = pneg %p68
        $region66: #{fused_forward.1} parent=63 // pred_check_branch
          %370 = sbr.rel (%p368) target = $region68
        $region67: #{fused_forward.1} parent=63 // pred_region
          %372 = dma.done [#allocation4], 5120
        $region68: #{fused_forward.1} parent=63 // pred_fallthru
          _
        // Predicated region
        $region69: #{fused_forward.1} parent=63 // pred_check
          %p373 = pneg %p110
        $region70: #{fused_forward.1} parent=63 // pred_check_branch
          %375 = sbr.rel (%p373) target = $region72
        $region71: #{fused_forward.1} parent=63 // pred_region
          %377 = dma.done [#allocation6], 16384
        $region72: #{fused_forward.1} parent=63 // pred_fallthru
          _
        %p378 = scmp.lt.s32.totalorder %s26, 1
        %s379 = scalar_select %p378, %s26, 1
        %s380 = smul.addr %s379, 8
        %s381 = scalar_lea.vmem %s0, %s380
        %p382 = pneg %p47
        %p383 = pneg %p44
        %p384 = pneg %p68
        %p385 = pneg %p65
        %p386 = pneg %p89
        %p387 = pneg %p86
        %p388 = pneg %p110
        %p389 = pneg %p107
        %p390 = pneg %p131
        %p391 = pneg %p128
        %p392 = pneg %p152
        %p393 = pneg %p149
        %p394 = pneg %p173
        %p395 = pneg %p170
        %p396 = pneg %p194
        %p397 = pneg %p191
        %p398 = pneg %p215
        %p399 = pneg %p212
        %p400 = pneg %p236
        %p401 = pneg %p233
        %p402 = pneg %p257
        %p403 = pneg %p254
        %p404 = pneg %p283
        %p405 = pneg %p280
        %p406 = scmp.lt.s32.totalorder %s26, 1
        %s407 = scalar_select %p406, %s26, 1
        %s408 = smul.addr %s407, 8
        %s409 = scalar_lea.vmem %s11, %s408
        %p410 = scmp.lt.s32.totalorder %s26, 1
        %s411 = scalar_select %p410, %s26, 1
        %s412 = smul.addr %s411, 8
        %s413 = scalar_lea.vmem %s0, %s412
        %p414 = scmp.lt.s32.totalorder %s26, 1
        %s415 = scalar_select %p414, %s26, 1
        %s416 = smul.addr %s415, 8
        %s417 = scalar_lea.vmem %s11, %s416
        %v419 = vld [vmem:[%s413] sm:$0xff]
        %v420 = vpack.c.bf16 %v419, %v419
        %v421 = vld [vmem:[#allocation3] sm:$0xff]
        %v422 = vld [vmem:[#allocation3 + $0x8] sm:$0xff]
        %v423 = vld [vmem:[#allocation3 + $0x10] sm:$0xff]
        %v424 = vld [vmem:[#allocation3 + $0x18] sm:$0xff]
        %v425 = vld [vmem:[#allocation3 + $0x20] sm:$0xff]
        %v426 = vld [vmem:[#allocation3 + $0x28] sm:$0xff]
        %v427 = vld [vmem:[#allocation3 + $0x30] sm:$0xff]
        %v428 = vld [vmem:[#allocation3 + $0x38] sm:$0xff]
        %v429 = vld [vmem:[#allocation3 + $0x40] sm:$0xff]
        %v430 = vld [vmem:[#allocation3 + $0x48] sm:$0xff]
        %v431 = vld [vmem:[#allocation3 + $0x50] sm:$0xff]
        %v432 = vld [vmem:[#allocation3 + $0x58] sm:$0xff]
        %v433 = vld [vmem:[#allocation3 + $0x60] sm:$0xff]
        %v434 = vld [vmem:[#allocation3 + $0x68] sm:$0xff]
        %v435 = vld [vmem:[#allocation3 + $0x70] sm:$0xff]
        %v436 = vld [vmem:[#allocation3 + $0x78] sm:$0xff]
        %v437 = vld [vmem:[#allocation3 + $0x80] sm:$0xff]
        %v438 = vld [vmem:[#allocation3 + $0x88] sm:$0xff]
        %v439 = vld [vmem:[#allocation3 + $0x90] sm:$0xff]
        %v440 = vld [vmem:[#allocation3 + $0x98] sm:$0xff]
        %v441 = vld [vmem:[#allocation3 + $0xa0] sm:$0xff]
        %v442 = vld [vmem:[#allocation3 + $0xa8] sm:$0xff]
        %v443 = vld [vmem:[#allocation3 + $0xb0] sm:$0xff]
        %v444 = vld [vmem:[#allocation3 + $0xb8] sm:$0xff]
        %v445 = vld [vmem:[#allocation3 + $0xc0] sm:$0xff]
        %v446 = vld [vmem:[#allocation3 + $0xc8] sm:$0xff]
        %v447 = vld [vmem:[#allocation3 + $0xd0] sm:$0xff]
        %v448 = vld [vmem:[#allocation3 + $0xd8] sm:$0xff]
        %v449 = vld [vmem:[#allocation3 + $0xe0] sm:$0xff]
        %v450 = vld [vmem:[#allocation3 + $0xe8] sm:$0xff]
        %v451 = vld [vmem:[#allocation3 + $0xf0] sm:$0xff]
        %v452 = vld [vmem:[#allocation3 + $0xf8] sm:$0xff]
        %v453 = vld [vmem:[#allocation3 + $0x100] sm:$0x33]
        %v454 = vld [vmem:[#allocation3 + $0x108] sm:$0x33]
        %v455 = vld [vmem:[#allocation3 + $0x110] sm:$0x33]
        %v456 = vld [vmem:[#allocation3 + $0x118] sm:$0x33]
        %v457 = vld [vmem:[#allocation3 + $0x120] sm:$0x33]
        %v458 = vld [vmem:[#allocation3 + $0x128] sm:$0x33]
        %v459 = vld [vmem:[#allocation3 + $0x130] sm:$0x33]
        %v460 = vld [vmem:[#allocation3 + $0x138] sm:$0x33]
        %v461 = vld [vmem:[%s2] sm:$0xff]
        %v462 = vld [vmem:[%s2 + $0x8] sm:$0xff]
        %v465 = vperm.slane %v461, 0
        %v466 = vperm.slane %v461, 1
        %v467 = vperm.slane %v461, 2
        %v468 = vperm.slane %v461, 3
        %v469 = vperm.slane %v461, 4
        %v470 = vperm.slane %v461, 5
        %v471 = vperm.slane %v461, 6
        %v472 = vperm.slane %v461, 7
        %v473 = vperm.slane %v462, 0
        %v474 = vperm.slane %v462, 1
        %v475 = vperm.slane %v462, 2
        %v476 = vperm.slane %v462, 3
        %v477 = vperm.slane %v462, 4
        %v478 = vperm.slane %v462, 5
        %v479 = vperm.slane %v462, 6
        %v480 = vperm.slane %v462, 7
        %v537 = vunpack.c.l.b16 %v421
        %v538 = vunpack.c.h.b16 %v421
        %v539 = vunpack.c.l.b16 %v422
        %v540 = vunpack.c.h.b16 %v422
        %v541 = vunpack.c.l.b16 %v423
        %v542 = vunpack.c.h.b16 %v423
        %v543 = vunpack.c.l.b16 %v424
        %v544 = vunpack.c.h.b16 %v424
        %v545 = vunpack.c.l.b16 %v425
        %v546 = vunpack.c.h.b16 %v425
        %v547 = vunpack.c.l.b16 %v426
        %v548 = vunpack.c.h.b16 %v426
        %v549 = vunpack.c.l.b16 %v427
        %v550 = vunpack.c.h.b16 %v427
        %v551 = vunpack.c.l.b16 %v428
        %v552 = vunpack.c.h.b16 %v428
        %v553 = vunpack.c.l.b16 %v429
        %v554 = vunpack.c.h.b16 %v429
        %v555 = vunpack.c.l.b16 %v430
        %v556 = vunpack.c.h.b16 %v430
        %v557 = vunpack.c.l.b16 %v431
        %v558 = vunpack.c.h.b16 %v431
        %v559 = vunpack.c.l.b16 %v432
        %v560 = vunpack.c.h.b16 %v432
        %v561 = vunpack.c.l.b16 %v433
        %v562 = vunpack.c.h.b16 %v433
        %v563 = vunpack.c.l.b16 %v434
        %v564 = vunpack.c.h.b16 %v434
        %v565 = vunpack.c.l.b16 %v435
        %v566 = vunpack.c.h.b16 %v435
        %v567 = vunpack.c.l.b16 %v436
        %v568 = vunpack.c.h.b16 %v436
        %v569 = vunpack.c.l.b16 %v437
        %v570 = vunpack.c.h.b16 %v437
        %v571 = vunpack.c.l.b16 %v438
        %v572 = vunpack.c.h.b16 %v438
        %v573 = vunpack.c.l.b16 %v439
        %v574 = vunpack.c.h.b16 %v439
        %v575 = vunpack.c.l.b16 %v440
        %v576 = vunpack.c.h.b16 %v440
        %v577 = vunpack.c.l.b16 %v441
        %v578 = vunpack.c.h.b16 %v441
        %v579 = vunpack.c.l.b16 %v442
        %v580 = vunpack.c.h.b16 %v442
        %v581 = vunpack.c.l.b16 %v443
        %v582 = vunpack.c.h.b16 %v443
        %v583 = vunpack.c.l.b16 %v444
        %v584 = vunpack.c.h.b16 %v444
        %v585 = vunpack.c.l.b16 %v445
        %v586 = vunpack.c.h.b16 %v445
        %v587 = vunpack.c.l.b16 %v446
        %v588 = vunpack.c.h.b16 %v446
        %v589 = vunpack.c.l.b16 %v447
        %v590 = vunpack.c.h.b16 %v447
        %v591 = vunpack.c.l.b16 %v448
        %v592 = vunpack.c.h.b16 %v448
        %v593 = vunpack.c.l.b16 %v449
        %v594 = vunpack.c.h.b16 %v449
        %v595 = vunpack.c.l.b16 %v450
        %v596 = vunpack.c.h.b16 %v450
        %v597 = vunpack.c.l.b16 %v451
        %v598 = vunpack.c.h.b16 %v451
        %v599 = vunpack.c.l.b16 %v452
        %v600 = vunpack.c.h.b16 %v452
        %v601 = vunpack.c.l.b16 %v453
        %v602 = vunpack.c.h.b16 %v453
        %v603 = vunpack.c.l.b16 %v454
        %v604 = vunpack.c.h.b16 %v454
        %v605 = vunpack.c.l.b16 %v455
        %v606 = vunpack.c.h.b16 %v455
        %v607 = vunpack.c.l.b16 %v456
        %v608 = vunpack.c.h.b16 %v456
        %v609 = vunpack.c.l.b16 %v457
        %v610 = vunpack.c.h.b16 %v457
        %v611 = vunpack.c.l.b16 %v458
        %v612 = vunpack.c.h.b16 %v458
        %v613 = vunpack.c.l.b16 %v459
        %v614 = vunpack.c.h.b16 %v459
        %v615 = vunpack.c.l.b16 %v460
        %v616 = vunpack.c.h.b16 %v460
        %v617 = vpack.c.b16 %v553, %v537
        %v618 = vpack.c.b16 %v554, %v538
        %v619 = vpack.c.b16 %v555, %v539
        %v620 = vpack.c.b16 %v556, %v540
        %v621 = vpack.c.b16 %v557, %v541
        %v622 = vpack.c.b16 %v558, %v542
        %v623 = vpack.c.b16 %v559, %v543
        %v624 = vpack.c.b16 %v560, %v544
        %v625 = vpack.c.b16 %v561, %v545
        %v626 = vpack.c.b16 %v562, %v546
        %v627 = vpack.c.b16 %v563, %v547
        %v628 = vpack.c.b16 %v564, %v548
        %v629 = vpack.c.b16 %v565, %v549
        %v630 = vpack.c.b16 %v566, %v550
        %v631 = vpack.c.b16 %v567, %v551
        %v632 = vpack.c.b16 %v568, %v552
        %v633 = vpack.c.b16 %v585, %v569
        %v634 = vpack.c.b16 %v586, %v570
        %v635 = vpack.c.b16 %v587, %v571
        %v636 = vpack.c.b16 %v588, %v572
        %v637 = vpack.c.b16 %v589, %v573
        %v638 = vpack.c.b16 %v590, %v574
        %v639 = vpack.c.b16 %v591, %v575
        %v640 = vpack.c.b16 %v592, %v576
        %v641 = vpack.c.b16 %v593, %v577
        %v642 = vpack.c.b16 %v594, %v578
        %v643 = vpack.c.b16 %v595, %v579
        %v644 = vpack.c.b16 %v596, %v580
        %v645 = vpack.c.b16 %v597, %v581
        %v646 = vpack.c.b16 %v598, %v582
        %v647 = vpack.c.b16 %v599, %v583
        %v648 = vpack.c.b16 %v600, %v584
        %v649 = vpack.c.b16 %v601, %v601
        %v650 = vpack.c.b16 %v602, %v602
        %v651 = vpack.c.b16 %v603, %v603
        %v652 = vpack.c.b16 %v604, %v604
        %v653 = vpack.c.b16 %v605, %v605
        %v654 = vpack.c.b16 %v606, %v606
        %v655 = vpack.c.b16 %v607, %v607
        %v656 = vpack.c.b16 %v608, %v608
        %v657 = vpack.c.b16 %v609, %v609
        %v658 = vpack.c.b16 %v610, %v610
        %v659 = vpack.c.b16 %v611, %v611
        %v660 = vpack.c.b16 %v612, %v612
        %v661 = vpack.c.b16 %v613, %v613
        %v662 = vpack.c.b16 %v614, %v614
        %v663 = vpack.c.b16 %v615, %v615
        %v664 = vpack.c.b16 %v616, %v616
        %vm697 = vcmask 293888
        %v699 = vsel %vm697, %v420, 0
        %vm701 = vcmask 1041408
        %v703 = vsel %vm701, %v649, 0
        %v706 = vsel %vm701, %v650, 0
        %v709 = vsel %vm701, %v651, 0
        %v712 = vsel %vm701, %v652, 0
        %v715 = vsel %vm701, %v653, 0
        %v718 = vsel %vm701, %v654, 0
        %v721 = vsel %vm701, %v655, 0
        %v724 = vsel %vm701, %v656, 0
        %v727 = vsel %vm701, %v657, 0
        %v730 = vsel %vm701, %v658, 0
        %v733 = vsel %vm701, %v659, 0
        %v736 = vsel %vm701, %v660, 0
        %v739 = vsel %vm701, %v661, 0
        %v742 = vsel %vm701, %v662, 0
        %v745 = vsel %vm701, %v663, 0
        %v748 = vsel %vm701, %v664, 0
        %750 = vmatpush.bf16.msra.mxu0 0
        %751 = vmatpush.bf16.msra.mxu0 0
        %752 = vmatpush.bf16.msra.mxu0 0
        %753 = vmatpush.bf16.msra.mxu0 0
        %754 = vmatpush.bf16.msra.mxu0 0
        %755 = vmatpush.bf16.msra.mxu0 %v703
        %756 = vmatpush.bf16.msra.mxu0 %v633
        %757 = vmatpush.bf16.msra.mxu0 %v617
        %758 = vmatmul.bf16.gmra.mxu0 %v699
        %v759 = vpop.f32.mrf.mxu0
        %v760 = vadd.f32 %v465, %v759
        %v761 = vpop.f32.mrf.mxu0
        %762 = vdwg.mxu0
        %763 = vmatpush.bf16.msra.mxu0 0
        %764 = vmatpush.bf16.msra.mxu0 0
        %765 = vmatpush.bf16.msra.mxu0 0
        %766 = vmatpush.bf16.msra.mxu0 0
        %767 = vmatpush.bf16.msra.mxu0 0
        %768 = vmatpush.bf16.msra.mxu0 %v706
        %769 = vmatpush.bf16.msra.mxu0 %v634
        %770 = vmatpush.bf16.msra.mxu0 %v618
        %771 = vmatmul.bf16.gmra.mxu0 %v699
        %v772 = vpop.f32.mrf.mxu0
        %v773 = vadd.f32 %v466, %v772
        %v774 = vpop.f32.mrf.mxu0
        %775 = vdwg.mxu0
        %776 = vmatpush.bf16.msra.mxu0 0
        %777 = vmatpush.bf16.msra.mxu0 0
        %778 = vmatpush.bf16.msra.mxu0 0
        %779 = vmatpush.bf16.msra.mxu0 0
        %780 = vmatpush.bf16.msra.mxu0 0
        %781 = vmatpush.bf16.msra.mxu0 %v709
        %782 = vmatpush.bf16.msra.mxu0 %v635
        %783 = vmatpush.bf16.msra.mxu0 %v619
        %784 = vmatmul.bf16.gmra.mxu0 %v699
        %v785 = vpop.f32.mrf.mxu0
        %v786 = vadd.f32 %v467, %v785
        %v787 = vpop.f32.mrf.mxu0
        %788 = vdwg.mxu0
        %789 = vmatpush.bf16.msra.mxu0 0
        %790 = vmatpush.bf16.msra.mxu0 0
        %791 = vmatpush.bf16.msra.mxu0 0
        %792 = vmatpush.bf16.msra.mxu0 0
        %793 = vmatpush.bf16.msra.mxu0 0
        %794 = vmatpush.bf16.msra.mxu0 %v712
        %795 = vmatpush.bf16.msra.mxu0 %v636
        %796 = vmatpush.bf16.msra.mxu0 %v620
        %797 = vmatmul.bf16.gmra.mxu0 %v699
        %v798 = vpop.f32.mrf.mxu0
        %v799 = vadd.f32 %v468, %v798
        %v800 = vpop.f32.mrf.mxu0
        %801 = vdwg.mxu0
        %802 = vmatpush.bf16.msra.mxu0 0
        %803 = vmatpush.bf16.msra.mxu0 0
        %804 = vmatpush.bf16.msra.mxu0 0
        %805 = vmatpush.bf16.msra.mxu0 0
        %806 = vmatpush.bf16.msra.mxu0 0
        %807 = vmatpush.bf16.msra.mxu0 %v715
        %808 = vmatpush.bf16.msra.mxu0 %v637
        %809 = vmatpush.bf16.msra.mxu0 %v621
        %810 = vmatmul.bf16.gmra.mxu0 %v699
        %v811 = vpop.f32.mrf.mxu0
        %v812 = vadd.f32 %v469, %v811
        %v813 = vpop.f32.mrf.mxu0
        %814 = vdwg.mxu0
        %815 = vmatpush.bf16.msra.mxu0 0
        %816 = vmatpush.bf16.msra.mxu0 0
        %817 = vmatpush.bf16.msra.mxu0 0
        %818 = vmatpush.bf16.msra.mxu0 0
        %819 = vmatpush.bf16.msra.mxu0 0
        %820 = vmatpush.bf16.msra.mxu0 %v718
        %821 = vmatpush.bf16.msra.mxu0 %v638
        %822 = vmatpush.bf16.msra.mxu0 %v622
        %823 = vmatmul.bf16.gmra.mxu0 %v699
        %v824 = vpop.f32.mrf.mxu0
        %v825 = vadd.f32 %v470, %v824
        %v826 = vpop.f32.mrf.mxu0
        %827 = vdwg.mxu0
        %828 = vmatpush.bf16.msra.mxu0 0
        %829 = vmatpush.bf16.msra.mxu0 0
        %830 = vmatpush.bf16.msra.mxu0 0
        %831 = vmatpush.bf16.msra.mxu0 0
        %832 = vmatpush.bf16.msra.mxu0 0
        %833 = vmatpush.bf16.msra.mxu0 %v721
        %834 = vmatpush.bf16.msra.mxu0 %v639
        %835 = vmatpush.bf16.msra.mxu0 %v623
        %836 = vmatmul.bf16.gmra.mxu0 %v699
        %v837 = vpop.f32.mrf.mxu0
        %v838 = vadd.f32 %v471, %v837
        %v839 = vpop.f32.mrf.mxu0
        %840 = vdwg.mxu0
        %841 = vmatpush.bf16.msra.mxu0 0
        %842 = vmatpush.bf16.msra.mxu0 0
        %843 = vmatpush.bf16.msra.mxu0 0
        %844 = vmatpush.bf16.msra.mxu0 0
        %845 = vmatpush.bf16.msra.mxu0 0
        %846 = vmatpush.bf16.msra.mxu0 %v724
        %847 = vmatpush.bf16.msra.mxu0 %v640
        %848 = vmatpush.bf16.msra.mxu0 %v624
        %849 = vmatmul.bf16.gmra.mxu0 %v699
        %v850 = vpop.f32.mrf.mxu0
        %v851 = vadd.f32 %v472, %v850
        %v852 = vpop.f32.mrf.mxu0
        %853 = vdwg.mxu0
        %854 = vmatpush.bf16.msra.mxu0 0
        %855 = vmatpush.bf16.msra.mxu0 0
        %856 = vmatpush.bf16.msra.mxu0 0
        %857 = vmatpush.bf16.msra.mxu0 0
        %858 = vmatpush.bf16.msra.mxu0 0
        %859 = vmatpush.bf16.msra.mxu0 %v727
        %860 = vmatpush.bf16.msra.mxu0 %v641
        %861 = vmatpush.bf16.msra.mxu0 %v625
        %862 = vmatmul.bf16.gmra.mxu0 %v699
        %v863 = vpop.f32.mrf.mxu0
        %v864 = vadd.f32 %v473, %v863
        %v865 = vpop.f32.mrf.mxu0
        %866 = vdwg.mxu0
        %867 = vmatpush.bf16.msra.mxu0 0
        %868 = vmatpush.bf16.msra.mxu0 0
        %869 = vmatpush.bf16.msra.mxu0 0
        %870 = vmatpush.bf16.msra.mxu0 0
        %871 = vmatpush.bf16.msra.mxu0 0
        %872 = vmatpush.bf16.msra.mxu0 %v730
        %873 = vmatpush.bf16.msra.mxu0 %v642
        %874 = vmatpush.bf16.msra.mxu0 %v626
        %875 = vmatmul.bf16.gmra.mxu0 %v699
        %v876 = vpop.f32.mrf.mxu0
        %v877 = vadd.f32 %v474, %v876
        %v878 = vpop.f32.mrf.mxu0
        %879 = vdwg.mxu0
        %880 = vmatpush.bf16.msra.mxu0 0
        %881 = vmatpush.bf16.msra.mxu0 0
        %882 = vmatpush.bf16.msra.mxu0 0
        %883 = vmatpush.bf16.msra.mxu0 0
        %884 = vmatpush.bf16.msra.mxu0 0
        %885 = vmatpush.bf16.msra.mxu0 %v733
        %886 = vmatpush.bf16.msra.mxu0 %v643
        %887 = vmatpush.bf16.msra.mxu0 %v627
        %888 = vmatmul.bf16.gmra.mxu0 %v699
        %v889 = vpop.f32.mrf.mxu0
        %v890 = vadd.f32 %v475, %v889
        %v891 = vpop.f32.mrf.mxu0
        %892 = vdwg.mxu0
        %893 = vmatpush.bf16.msra.mxu0 0
        %894 = vmatpush.bf16.msra.mxu0 0
        %895 = vmatpush.bf16.msra.mxu0 0
        %896 = vmatpush.bf16.msra.mxu0 0
        %897 = vmatpush.bf16.msra.mxu0 0
        %898 = vmatpush.bf16.msra.mxu0 %v736
        %899 = vmatpush.bf16.msra.mxu0 %v644
        %900 = vmatpush.bf16.msra.mxu0 %v628
        %901 = vmatmul.bf16.gmra.mxu0 %v699
        %v902 = vpop.f32.mrf.mxu0
        %v903 = vadd.f32 %v476, %v902
        %v904 = vpop.f32.mrf.mxu0
        %905 = vdwg.mxu0
        %906 = vmatpush.bf16.msra.mxu0 0
        %907 = vmatpush.bf16.msra.mxu0 0
        %908 = vmatpush.bf16.msra.mxu0 0
        %909 = vmatpush.bf16.msra.mxu0 0
        %910 = vmatpush.bf16.msra.mxu0 0
        %911 = vmatpush.bf16.msra.mxu0 %v739
        %912 = vmatpush.bf16.msra.mxu0 %v645
        %913 = vmatpush.bf16.msra.mxu0 %v629
        %914 = vmatmul.bf16.gmra.mxu0 %v699
        %v915 = vpop.f32.mrf.mxu0
        %v916 = vadd.f32 %v477, %v915
        %v917 = vpop.f32.mrf.mxu0
        %918 = vdwg.mxu0
        %919 = vmatpush.bf16.msra.mxu0 0
        %920 = vmatpush.bf16.msra.mxu0 0
        %921 = vmatpush.bf16.msra.mxu0 0
        %922 = vmatpush.bf16.msra.mxu0 0
        %923 = vmatpush.bf16.msra.mxu0 0
        %924 = vmatpush.bf16.msra.mxu0 %v742
        %925 = vmatpush.bf16.msra.mxu0 %v646
        %926 = vmatpush.bf16.msra.mxu0 %v630
        %927 = vmatmul.bf16.gmra.mxu0 %v699
        %v928 = vpop.f32.mrf.mxu0
        %v929 = vadd.f32 %v478, %v928
        %v930 = vpop.f32.mrf.mxu0
        %931 = vdwg.mxu0
        %932 = vmatpush.bf16.msra.mxu0 0
        %933 = vmatpush.bf16.msra.mxu0 0
        %934 = vmatpush.bf16.msra.mxu0 0
        %935 = vmatpush.bf16.msra.mxu0 0
        %936 = vmatpush.bf16.msra.mxu0 0
        %937 = vmatpush.bf16.msra.mxu0 %v745
        %938 = vmatpush.bf16.msra.mxu0 %v647
        %939 = vmatpush.bf16.msra.mxu0 %v631
        %940 = vmatmul.bf16.gmra.mxu0 %v699
        %v941 = vpop.f32.mrf.mxu0
        %v942 = vadd.f32 %v479, %v941
        %v943 = vpop.f32.mrf.mxu0
        %944 = vdwg.mxu0
        %945 = vmatpush.bf16.msra.mxu0 0
        %946 = vmatpush.bf16.msra.mxu0 0
        %947 = vmatpush.bf16.msra.mxu0 0
        %948 = vmatpush.bf16.msra.mxu0 0
        %949 = vmatpush.bf16.msra.mxu0 0
        %950 = vmatpush.bf16.msra.mxu0 %v748
        %951 = vmatpush.bf16.msra.mxu0 %v648
        %952 = vmatpush.bf16.msra.mxu0 %v632
        %953 = vmatmul.bf16.gmra.mxu0 %v699
        %v954 = vpop.f32.mrf.mxu0
        %v955 = vadd.f32 %v480, %v954
        %v956 = vpop.f32.mrf.mxu0
        %957 = vdwg.mxu0
        %v958 = vpack.c.bf16 %v760, %v760
        %v959 = vpack.c.bf16 %v773, %v773
        %v960 = vpack.c.bf16 %v786, %v786
        %v961 = vpack.c.bf16 %v799, %v799
        %v962 = vpack.c.bf16 %v812, %v812
        %v963 = vpack.c.bf16 %v825, %v825
        %v964 = vpack.c.bf16 %v838, %v838
        %v965 = vpack.c.bf16 %v851, %v851
        %v966 = vpack.c.bf16 %v864, %v864
        %v967 = vpack.c.bf16 %v877, %v877
        %v968 = vpack.c.bf16 %v890, %v890
        %v969 = vpack.c.bf16 %v903, %v903
        %v970 = vpack.c.bf16 %v916, %v916
        %v971 = vpack.c.bf16 %v929, %v929
        %v972 = vpack.c.bf16 %v942, %v942
        %v973 = vpack.c.bf16 %v955, %v955
        %v974 = vld [vmem:[#allocation5] sm:$0xf]
        %v975 = vld [vmem:[#allocation5 + $0x4] sm:$0xf]
        %v976 = vld [vmem:[#allocation5 + $0x8] sm:$0xf]
        %v977 = vld [vmem:[#allocation5 + $0xc] sm:$0xf]
        %v978 = vld [vmem:[#allocation5 + $0x10] sm:$0xf]
        %v979 = vld [vmem:[#allocation5 + $0x14] sm:$0xf]
        %v980 = vld [vmem:[#allocation5 + $0x18] sm:$0xf]
        %v981 = vld [vmem:[#allocation5 + $0x1c] sm:$0xf]
        %v982 = vld [vmem:[#allocation5 + $0x20] sm:$0xf]
        %v983 = vld [vmem:[#allocation5 + $0x24] sm:$0xf]
        %v984 = vld [vmem:[#allocation5 + $0x28] sm:$0xf]
        %v985 = vld [vmem:[#allocation5 + $0x2c] sm:$0xf]
        %v986 = vld [vmem:[#allocation5 + $0x30] sm:$0xf]
        %v987 = vld [vmem:[#allocation5 + $0x34] sm:$0xf]
        %v988 = vld [vmem:[#allocation5 + $0x38] sm:$0xf]
        %v989 = vld [vmem:[#allocation5 + $0x3c] sm:$0xf]
        %v990 = vld [vmem:[#allocation5 + $0x40] sm:$0xf]
        %v991 = vld [vmem:[#allocation5 + $0x44] sm:$0xf]
        %v992 = vld [vmem:[#allocation5 + $0x48] sm:$0xf]
        %v993 = vld [vmem:[#allocation5 + $0x4c] sm:$0xf]
        %v994 = vld [vmem:[#allocation5 + $0x50] sm:$0xf]
        %v995 = vld [vmem:[#allocation5 + $0x54] sm:$0xf]
        %v996 = vld [vmem:[#allocation5 + $0x58] sm:$0xf]
        %v997 = vld [vmem:[#allocation5 + $0x5c] sm:$0xf]
        %v998 = vld [vmem:[#allocation5 + $0x60] sm:$0xf]
        %v999 = vld [vmem:[#allocation5 + $0x64] sm:$0xf]
        %v1000 = vld [vmem:[#allocation5 + $0x68] sm:$0xf]
        %v1001 = vld [vmem:[#allocation5 + $0x6c] sm:$0xf]
        %v1002 = vld [vmem:[#allocation5 + $0x70] sm:$0xf]
        %v1003 = vld [vmem:[#allocation5 + $0x74] sm:$0xf]
        %v1004 = vld [vmem:[#allocation5 + $0x78] sm:$0xf]
        %v1005 = vld [vmem:[#allocation5 + $0x7c] sm:$0xf]
        %v1006 = vld [vmem:[#allocation5 + $0x80] sm:$0xf]
        %v1007 = vld [vmem:[#allocation5 + $0x84] sm:$0xf]
        %v1008 = vld [vmem:[#allocation5 + $0x88] sm:$0xf]
        %v1009 = vld [vmem:[#allocation5 + $0x8c] sm:$0xf]
        %v1010 = vld [vmem:[#allocation5 + $0x90] sm:$0xf]
        %v1011 = vld [vmem:[#allocation5 + $0x94] sm:$0xf]
        %v1012 = vld [vmem:[#allocation5 + $0x98] sm:$0xf]
        %v1013 = vld [vmem:[#allocation5 + $0x9c] sm:$0xf]
        %v1014 = vld [vmem:[#allocation5 + $0xa0] sm:$0xf]
        %v1015 = vld [vmem:[#allocation5 + $0xa4] sm:$0xf]
        %v1016 = vld [vmem:[#allocation5 + $0xa8] sm:$0xf]
        %v1017 = vld [vmem:[#allocation5 + $0xac] sm:$0xf]
        %v1018 = vld [vmem:[#allocation5 + $0xb0] sm:$0xf]
        %v1019 = vld [vmem:[#allocation5 + $0xb4] sm:$0xf]
        %v1020 = vld [vmem:[#allocation5 + $0xb8] sm:$0xf]
        %v1021 = vld [vmem:[#allocation5 + $0xbc] sm:$0xf]
        %v1022 = vld [vmem:[#allocation5 + $0xc0] sm:$0xf]
        %v1023 = vld [vmem:[#allocation5 + $0xc4] sm:$0xf]
        %v1024 = vld [vmem:[#allocation5 + $0xc8] sm:$0xf]
        %v1025 = vld [vmem:[#allocation5 + $0xcc] sm:$0xf]
        %v1026 = vld [vmem:[#allocation5 + $0xd0] sm:$0xf]
        %v1027 = vld [vmem:[#allocation5 + $0xd4] sm:$0xf]
        %v1028 = vld [vmem:[#allocation5 + $0xd8] sm:$0xf]
        %v1029 = vld [vmem:[#allocation5 + $0xdc] sm:$0xf]
        %v1030 = vld [vmem:[#allocation5 + $0xe0] sm:$0xf]
        %v1031 = vld [vmem:[#allocation5 + $0xe4] sm:$0xf]
        %v1032 = vld [vmem:[#allocation5 + $0xe8] sm:$0xf]
        %v1033 = vld [vmem:[#allocation5 + $0xec] sm:$0xf]
        %v1034 = vld [vmem:[#allocation5 + $0xf0] sm:$0xf]
        %v1035 = vld [vmem:[#allocation5 + $0xf4] sm:$0xf]
        %v1036 = vld [vmem:[#allocation5 + $0xf8] sm:$0xf]
        %v1037 = vld [vmem:[#allocation5 + $0xfc] sm:$0xf]
        %v1038 = vld [vmem:[#allocation5 + $0x100] sm:$0xf]
        %v1039 = vld [vmem:[#allocation5 + $0x104] sm:$0xf]
        %v1040 = vld [vmem:[#allocation5 + $0x108] sm:$0xf]
        %v1041 = vld [vmem:[#allocation5 + $0x10c] sm:$0xf]
        %v1042 = vld [vmem:[#allocation5 + $0x110] sm:$0xf]
        %v1043 = vld [vmem:[#allocation5 + $0x114] sm:$0xf]
        %v1044 = vld [vmem:[#allocation5 + $0x118] sm:$0xf]
        %v1045 = vld [vmem:[#allocation5 + $0x11c] sm:$0xf]
        %v1046 = vld [vmem:[#allocation5 + $0x120] sm:$0xf]
        %v1047 = vld [vmem:[#allocation5 + $0x124] sm:$0xf]
        %v1048 = vld [vmem:[#allocation5 + $0x128] sm:$0xf]
        %v1049 = vld [vmem:[#allocation5 + $0x12c] sm:$0xf]
        %v1050 = vld [vmem:[#allocation5 + $0x130] sm:$0xf]
        %v1051 = vld [vmem:[#allocation5 + $0x134] sm:$0xf]
        %v1052 = vld [vmem:[#allocation5 + $0x138] sm:$0xf]
        %v1053 = vld [vmem:[#allocation5 + $0x13c] sm:$0xf]
        %v1054 = vld [vmem:[#allocation5 + $0x140] sm:$0xf]
        %v1055 = vld [vmem:[#allocation5 + $0x144] sm:$0xf]
        %v1056 = vld [vmem:[#allocation5 + $0x148] sm:$0xf]
        %v1057 = vld [vmem:[#allocation5 + $0x14c] sm:$0xf]
        %v1058 = vld [vmem:[#allocation5 + $0x150] sm:$0xf]
        %v1059 = vld [vmem:[#allocation5 + $0x154] sm:$0xf]
        %v1060 = vld [vmem:[#allocation5 + $0x158] sm:$0xf]
        %v1061 = vld [vmem:[#allocation5 + $0x15c] sm:$0xf]
        %v1062 = vld [vmem:[#allocation5 + $0x160] sm:$0xf]
        %v1063 = vld [vmem:[#allocation5 + $0x164] sm:$0xf]
        %v1064 = vld [vmem:[#allocation5 + $0x168] sm:$0xf]
        %v1065 = vld [vmem:[#allocation5 + $0x16c] sm:$0xf]
        %v1066 = vld [vmem:[#allocation5 + $0x170] sm:$0xf]
        %v1067 = vld [vmem:[#allocation5 + $0x174] sm:$0xf]
        %v1068 = vld [vmem:[#allocation5 + $0x178] sm:$0xf]
        %v1069 = vld [vmem:[#allocation5 + $0x17c] sm:$0xf]
        %v1070 = vld [vmem:[#allocation5 + $0x180] sm:$0xf]
        %v1071 = vld [vmem:[#allocation5 + $0x184] sm:$0xf]
        %v1072 = vld [vmem:[#allocation5 + $0x188] sm:$0xf]
        %v1073 = vld [vmem:[#allocation5 + $0x18c] sm:$0xf]
        %v1074 = vld [vmem:[#allocation5 + $0x190] sm:$0xf]
        %v1075 = vld [vmem:[#allocation5 + $0x194] sm:$0xf]
        %v1076 = vld [vmem:[#allocation5 + $0x198] sm:$0xf]
        %v1077 = vld [vmem:[#allocation5 + $0x19c] sm:$0xf]
        %v1078 = vld [vmem:[#allocation5 + $0x1a0] sm:$0xf]
        %v1079 = vld [vmem:[#allocation5 + $0x1a4] sm:$0xf]
        %v1080 = vld [vmem:[#allocation5 + $0x1a8] sm:$0xf]
        %v1081 = vld [vmem:[#allocation5 + $0x1ac] sm:$0xf]
        %v1082 = vld [vmem:[#allocation5 + $0x1b0] sm:$0xf]
        %v1083 = vld [vmem:[#allocation5 + $0x1b4] sm:$0xf]
        %v1084 = vld [vmem:[#allocation5 + $0x1b8] sm:$0xf]
        %v1085 = vld [vmem:[#allocation5 + $0x1bc] sm:$0xf]
        %v1086 = vld [vmem:[#allocation5 + $0x1c0] sm:$0xf]
        %v1087 = vld [vmem:[#allocation5 + $0x1c4] sm:$0xf]
        %v1088 = vld [vmem:[#allocation5 + $0x1c8] sm:$0xf]
        %v1089 = vld [vmem:[#allocation5 + $0x1cc] sm:$0xf]
        %v1090 = vld [vmem:[#allocation5 + $0x1d0] sm:$0xf]
        %v1091 = vld [vmem:[#allocation5 + $0x1d4] sm:$0xf]
        %v1092 = vld [vmem:[#allocation5 + $0x1d8] sm:$0xf]
        %v1093 = vld [vmem:[#allocation5 + $0x1dc] sm:$0xf]
        %v1094 = vld [vmem:[#allocation5 + $0x1e0] sm:$0xf]
        %v1095 = vld [vmem:[#allocation5 + $0x1e4] sm:$0xf]
        %v1096 = vld [vmem:[#allocation5 + $0x1e8] sm:$0xf]
        %v1097 = vld [vmem:[#allocation5 + $0x1ec] sm:$0xf]
        %v1098 = vld [vmem:[#allocation5 + $0x1f0] sm:$0xf]
        %v1099 = vld [vmem:[#allocation5 + $0x1f4] sm:$0xf]
        %v1100 = vld [vmem:[#allocation5 + $0x1f8] sm:$0xf]
        %v1101 = vld [vmem:[#allocation5 + $0x1fc] sm:$0xf]
        %v1102 = vld [vmem:[#allocation5 + $0x200] sm:$0xf]
        %v1103 = vld [vmem:[#allocation5 + $0x204] sm:$0xf]
        %v1104 = vld [vmem:[#allocation5 + $0x208] sm:$0xf]
        %v1105 = vld [vmem:[#allocation5 + $0x20c] sm:$0xf]
        %v1106 = vld [vmem:[#allocation5 + $0x210] sm:$0xf]
        %v1107 = vld [vmem:[#allocation5 + $0x214] sm:$0xf]
        %v1108 = vld [vmem:[#allocation5 + $0x218] sm:$0xf]
        %v1109 = vld [vmem:[#allocation5 + $0x21c] sm:$0xf]
        %v1110 = vld [vmem:[#allocation5 + $0x220] sm:$0xf]
        %v1111 = vld [vmem:[#allocation5 + $0x224] sm:$0xf]
        %v1112 = vld [vmem:[#allocation5 + $0x228] sm:$0xf]
        %v1113 = vld [vmem:[#allocation5 + $0x22c] sm:$0xf]
        %v1114 = vld [vmem:[#allocation5 + $0x230] sm:$0xf]
        %v1115 = vld [vmem:[#allocation5 + $0x234] sm:$0xf]
        %v1116 = vld [vmem:[#allocation5 + $0x238] sm:$0xf]
        %v1117 = vld [vmem:[#allocation5 + $0x23c] sm:$0xf]
        %v1118 = vld [vmem:[#allocation5 + $0x240] sm:$0xf]
        %v1119 = vld [vmem:[#allocation5 + $0x244] sm:$0xf]
        %v1120 = vld [vmem:[#allocation5 + $0x248] sm:$0xf]
        %v1121 = vld [vmem:[#allocation5 + $0x24c] sm:$0xf]
        %v1122 = vld [vmem:[#allocation5 + $0x250] sm:$0xf]
        %v1123 = vld [vmem:[#allocation5 + $0x254] sm:$0xf]
        %v1124 = vld [vmem:[#allocation5 + $0x258] sm:$0xf]
        %v1125 = vld [vmem:[#allocation5 + $0x25c] sm:$0xf]
        %v1126 = vld [vmem:[#allocation5 + $0x260] sm:$0xf]
        %v1127 = vld [vmem:[#allocation5 + $0x264] sm:$0xf]
        %v1128 = vld [vmem:[#allocation5 + $0x268] sm:$0xf]
        %v1129 = vld [vmem:[#allocation5 + $0x26c] sm:$0xf]
        %v1130 = vld [vmem:[#allocation5 + $0x270] sm:$0xf]
        %v1131 = vld [vmem:[#allocation5 + $0x274] sm:$0xf]
        %v1132 = vld [vmem:[#allocation5 + $0x278] sm:$0xf]
        %v1133 = vld [vmem:[#allocation5 + $0x27c] sm:$0xf]
        %v1134 = vld [vmem:[#allocation5 + $0x280] sm:$0xf]
        %v1135 = vld [vmem:[#allocation5 + $0x284] sm:$0xf]
        %v1136 = vld [vmem:[#allocation5 + $0x288] sm:$0xf]
        %v1137 = vld [vmem:[#allocation5 + $0x28c] sm:$0xf]
        %v1138 = vld [vmem:[#allocation5 + $0x290] sm:$0xf]
        %v1139 = vld [vmem:[#allocation5 + $0x294] sm:$0xf]
        %v1140 = vld [vmem:[#allocation5 + $0x298] sm:$0xf]
        %v1141 = vld [vmem:[#allocation5 + $0x29c] sm:$0xf]
        %v1142 = vld [vmem:[#allocation5 + $0x2a0] sm:$0xf]
        %v1143 = vld [vmem:[#allocation5 + $0x2a4] sm:$0xf]
        %v1144 = vld [vmem:[#allocation5 + $0x2a8] sm:$0xf]
        %v1145 = vld [vmem:[#allocation5 + $0x2ac] sm:$0xf]
        %v1146 = vld [vmem:[#allocation5 + $0x2b0] sm:$0xf]
        %v1147 = vld [vmem:[#allocation5 + $0x2b4] sm:$0xf]
        %v1148 = vld [vmem:[#allocation5 + $0x2b8] sm:$0xf]
        %v1149 = vld [vmem:[#allocation5 + $0x2bc] sm:$0xf]
        %v1150 = vld [vmem:[#allocation5 + $0x2c0] sm:$0xf]
        %v1151 = vld [vmem:[#allocation5 + $0x2c4] sm:$0xf]
        %v1152 = vld [vmem:[#allocation5 + $0x2c8] sm:$0xf]
        %v1153 = vld [vmem:[#allocation5 + $0x2cc] sm:$0xf]
        %v1154 = vld [vmem:[#allocation5 + $0x2d0] sm:$0xf]
        %v1155 = vld [vmem:[#allocation5 + $0x2d4] sm:$0xf]
        %v1156 = vld [vmem:[#allocation5 + $0x2d8] sm:$0xf]
        %v1157 = vld [vmem:[#allocation5 + $0x2dc] sm:$0xf]
        %v1158 = vld [vmem:[#allocation5 + $0x2e0] sm:$0xf]
        %v1159 = vld [vmem:[#allocation5 + $0x2e4] sm:$0xf]
        %v1160 = vld [vmem:[#allocation5 + $0x2e8] sm:$0xf]
        %v1161 = vld [vmem:[#allocation5 + $0x2ec] sm:$0xf]
        %v1162 = vld [vmem:[#allocation5 + $0x2f0] sm:$0xf]
        %v1163 = vld [vmem:[#allocation5 + $0x2f4] sm:$0xf]
        %v1164 = vld [vmem:[#allocation5 + $0x2f8] sm:$0xf]
        %v1165 = vld [vmem:[#allocation5 + $0x2fc] sm:$0xf]
        %v1166 = vld [vmem:[#allocation5 + $0x300] sm:$0xf]
        %v1167 = vld [vmem:[#allocation5 + $0x304] sm:$0xf]
        %v1168 = vld [vmem:[#allocation5 + $0x308] sm:$0xf]
        %v1169 = vld [vmem:[#allocation5 + $0x30c] sm:$0xf]
        %v1170 = vld [vmem:[#allocation5 + $0x310] sm:$0xf]
        %v1171 = vld [vmem:[#allocation5 + $0x314] sm:$0xf]
        %v1172 = vld [vmem:[#allocation5 + $0x318] sm:$0xf]
        %v1173 = vld [vmem:[#allocation5 + $0x31c] sm:$0xf]
        %v1174 = vld [vmem:[#allocation5 + $0x320] sm:$0xf]
        %v1175 = vld [vmem:[#allocation5 + $0x324] sm:$0xf]
        %v1176 = vld [vmem:[#allocation5 + $0x328] sm:$0xf]
        %v1177 = vld [vmem:[#allocation5 + $0x32c] sm:$0xf]
        %v1178 = vld [vmem:[#allocation5 + $0x330] sm:$0xf]
        %v1179 = vld [vmem:[#allocation5 + $0x334] sm:$0xf]
        %v1180 = vld [vmem:[#allocation5 + $0x338] sm:$0xf]
        %v1181 = vld [vmem:[#allocation5 + $0x33c] sm:$0xf]
        %v1182 = vld [vmem:[#allocation5 + $0x340] sm:$0xf]
        %v1183 = vld [vmem:[#allocation5 + $0x344] sm:$0xf]
        %v1184 = vld [vmem:[#allocation5 + $0x348] sm:$0xf]
        %v1185 = vld [vmem:[#allocation5 + $0x34c] sm:$0xf]
        %v1186 = vld [vmem:[#allocation5 + $0x350] sm:$0xf]
        %v1187 = vld [vmem:[#allocation5 + $0x354] sm:$0xf]
        %v1188 = vld [vmem:[#allocation5 + $0x358] sm:$0xf]
        %v1189 = vld [vmem:[#allocation5 + $0x35c] sm:$0xf]
        %v1190 = vld [vmem:[#allocation5 + $0x360] sm:$0xf]
        %v1191 = vld [vmem:[#allocation5 + $0x364] sm:$0xf]
        %v1192 = vld [vmem:[#allocation5 + $0x368] sm:$0xf]
        %v1193 = vld [vmem:[#allocation5 + $0x36c] sm:$0xf]
        %v1194 = vld [vmem:[#allocation5 + $0x370] sm:$0xf]
        %v1195 = vld [vmem:[#allocation5 + $0x374] sm:$0xf]
        %v1196 = vld [vmem:[#allocation5 + $0x378] sm:$0xf]
        %v1197 = vld [vmem:[#allocation5 + $0x37c] sm:$0xf]
        %v1198 = vld [vmem:[#allocation5 + $0x380] sm:$0xf]
        %v1199 = vld [vmem:[#allocation5 + $0x384] sm:$0xf]
        %v1200 = vld [vmem:[#allocation5 + $0x388] sm:$0xf]
        %v1201 = vld [vmem:[#allocation5 + $0x38c] sm:$0xf]
        %v1202 = vld [vmem:[#allocation5 + $0x390] sm:$0xf]
        %v1203 = vld [vmem:[#allocation5 + $0x394] sm:$0xf]
        %v1204 = vld [vmem:[#allocation5 + $0x398] sm:$0xf]
        %v1205 = vld [vmem:[#allocation5 + $0x39c] sm:$0xf]
        %v1206 = vld [vmem:[#allocation5 + $0x3a0] sm:$0xf]
        %v1207 = vld [vmem:[#allocation5 + $0x3a4] sm:$0xf]
        %v1208 = vld [vmem:[#allocation5 + $0x3a8] sm:$0xf]
        %v1209 = vld [vmem:[#allocation5 + $0x3ac] sm:$0xf]
        %v1210 = vld [vmem:[#allocation5 + $0x3b0] sm:$0xf]
        %v1211 = vld [vmem:[#allocation5 + $0x3b4] sm:$0xf]
        %v1212 = vld [vmem:[#allocation5 + $0x3b8] sm:$0xf]
        %v1213 = vld [vmem:[#allocation5 + $0x3bc] sm:$0xf]
        %v1214 = vld [vmem:[#allocation5 + $0x3c0] sm:$0xf]
        %v1215 = vld [vmem:[#allocation5 + $0x3c4] sm:$0xf]
        %v1216 = vld [vmem:[#allocation5 + $0x3c8] sm:$0xf]
        %v1217 = vld [vmem:[#allocation5 + $0x3cc] sm:$0xf]
        %v1218 = vld [vmem:[#allocation5 + $0x3d0] sm:$0xf]
        %v1219 = vld [vmem:[#allocation5 + $0x3d4] sm:$0xf]
        %v1220 = vld [vmem:[#allocation5 + $0x3d8] sm:$0xf]
        %v1221 = vld [vmem:[#allocation5 + $0x3dc] sm:$0xf]
        %v1222 = vld [vmem:[#allocation5 + $0x3e0] sm:$0xf]
        %v1223 = vld [vmem:[#allocation5 + $0x3e4] sm:$0xf]
        %v1224 = vld [vmem:[#allocation5 + $0x3e8] sm:$0xf]
        %v1225 = vld [vmem:[#allocation5 + $0x3ec] sm:$0xf]
        %v1226 = vld [vmem:[#allocation5 + $0x3f0] sm:$0xf]
        %v1227 = vld [vmem:[#allocation5 + $0x3f4] sm:$0xf]
        %v1228 = vld [vmem:[#allocation5 + $0x3f8] sm:$0xf]
        %v1229 = vld [vmem:[#allocation5 + $0x3fc] sm:$0xf]
        %v1230 = vld [vmem:[%s4] sm:$0x1]
        %v1232 = vperm.slane %v1230, 0
        %v1490 = vunpack.c.l.b16 %v974
        %v1491 = vunpack.c.l.b16 %v975
        %v1492 = vunpack.c.l.b16 %v976
        %v1493 = vunpack.c.l.b16 %v977
        %v1494 = vunpack.c.l.b16 %v978
        %v1495 = vunpack.c.l.b16 %v979
        %v1496 = vunpack.c.l.b16 %v980
        %v1497 = vunpack.c.l.b16 %v981
        %v1498 = vunpack.c.l.b16 %v982
        %v1499 = vunpack.c.l.b16 %v983
        %v1500 = vunpack.c.l.b16 %v984
        %v1501 = vunpack.c.l.b16 %v985
        %v1502 = vunpack.c.l.b16 %v986
        %v1503 = vunpack.c.l.b16 %v987
        %v1504 = vunpack.c.l.b16 %v988
        %v1505 = vunpack.c.l.b16 %v989
        %v1506 = vunpack.c.l.b16 %v990
        %v1507 = vunpack.c.l.b16 %v991
        %v1508 = vunpack.c.l.b16 %v992
        %v1509 = vunpack.c.l.b16 %v993
        %v1510 = vunpack.c.l.b16 %v994
        %v1511 = vunpack.c.l.b16 %v995
        %v1512 = vunpack.c.l.b16 %v996
        %v1513 = vunpack.c.l.b16 %v997
        %v1514 = vunpack.c.l.b16 %v998
        %v1515 = vunpack.c.l.b16 %v999
        %v1516 = vunpack.c.l.b16 %v1000
        %v1517 = vunpack.c.l.b16 %v1001
        %v1518 = vunpack.c.l.b16 %v1002
        %v1519 = vunpack.c.l.b16 %v1003
        %v1520 = vunpack.c.l.b16 %v1004
        %v1521 = vunpack.c.l.b16 %v1005
        %v1522 = vunpack.c.l.b16 %v1006
        %v1523 = vunpack.c.l.b16 %v1007
        %v1524 = vunpack.c.l.b16 %v1008
        %v1525 = vunpack.c.l.b16 %v1009
        %v1526 = vunpack.c.l.b16 %v1010
        %v1527 = vunpack.c.l.b16 %v1011
        %v1528 = vunpack.c.l.b16 %v1012
        %v1529 = vunpack.c.l.b16 %v1013
        %v1530 = vunpack.c.l.b16 %v1014
        %v1531 = vunpack.c.l.b16 %v1015
        %v1532 = vunpack.c.l.b16 %v1016
        %v1533 = vunpack.c.l.b16 %v1017
        %v1534 = vunpack.c.l.b16 %v1018
        %v1535 = vunpack.c.l.b16 %v1019
        %v1536 = vunpack.c.l.b16 %v1020
        %v1537 = vunpack.c.l.b16 %v1021
        %v1538 = vunpack.c.l.b16 %v1022
        %v1539 = vunpack.c.l.b16 %v1023
        %v1540 = vunpack.c.l.b16 %v1024
        %v1541 = vunpack.c.l.b16 %v1025
        %v1542 = vunpack.c.l.b16 %v1026
        %v1543 = vunpack.c.l.b16 %v1027
        %v1544 = vunpack.c.l.b16 %v1028
        %v1545 = vunpack.c.l.b16 %v1029
        %v1546 = vunpack.c.l.b16 %v1030
        %v1547 = vunpack.c.l.b16 %v1031
        %v1548 = vunpack.c.l.b16 %v1032
        %v1549 = vunpack.c.l.b16 %v1033
        %v1550 = vunpack.c.l.b16 %v1034
        %v1551 = vunpack.c.l.b16 %v1035
        %v1552 = vunpack.c.l.b16 %v1036
        %v1553 = vunpack.c.l.b16 %v1037
        %v1554 = vunpack.c.l.b16 %v1038
        %v1555 = vunpack.c.l.b16 %v1039
        %v1556 = vunpack.c.l.b16 %v1040
        %v1557 = vunpack.c.l.b16 %v1041
        %v1558 = vunpack.c.l.b16 %v1042
        %v1559 = vunpack.c.l.b16 %v1043
        %v1560 = vunpack.c.l.b16 %v1044
        %v1561 = vunpack.c.l.b16 %v1045
        %v1562 = vunpack.c.l.b16 %v1046
        %v1563 = vunpack.c.l.b16 %v1047
        %v1564 = vunpack.c.l.b16 %v1048
        %v1565 = vunpack.c.l.b16 %v1049
        %v1566 = vunpack.c.l.b16 %v1050
        %v1567 = vunpack.c.l.b16 %v1051
        %v1568 = vunpack.c.l.b16 %v1052
        %v1569 = vunpack.c.l.b16 %v1053
        %v1570 = vunpack.c.l.b16 %v1054
        %v1571 = vunpack.c.l.b16 %v1055
        %v1572 = vunpack.c.l.b16 %v1056
        %v1573 = vunpack.c.l.b16 %v1057
        %v1574 = vunpack.c.l.b16 %v1058
        %v1575 = vunpack.c.l.b16 %v1059
        %v1576 = vunpack.c.l.b16 %v1060
        %v1577 = vunpack.c.l.b16 %v1061
        %v1578 = vunpack.c.l.b16 %v1062
        %v1579 = vunpack.c.l.b16 %v1063
        %v1580 = vunpack.c.l.b16 %v1064
        %v1581 = vunpack.c.l.b16 %v1065
        %v1582 = vunpack.c.l.b16 %v1066
        %v1583 = vunpack.c.l.b16 %v1067
        %v1584 = vunpack.c.l.b16 %v1068
        %v1585 = vunpack.c.l.b16 %v1069
        %v1586 = vunpack.c.l.b16 %v1070
        %v1587 = vunpack.c.l.b16 %v1071
        %v1588 = vunpack.c.l.b16 %v1072
        %v1589 = vunpack.c.l.b16 %v1073
        %v1590 = vunpack.c.l.b16 %v1074
        %v1591 = vunpack.c.l.b16 %v1075
        %v1592 = vunpack.c.l.b16 %v1076
        %v1593 = vunpack.c.l.b16 %v1077
        %v1594 = vunpack.c.l.b16 %v1078
        %v1595 = vunpack.c.l.b16 %v1079
        %v1596 = vunpack.c.l.b16 %v1080
        %v1597 = vunpack.c.l.b16 %v1081
        %v1598 = vunpack.c.l.b16 %v1082
        %v1599 = vunpack.c.l.b16 %v1083
        %v1600 = vunpack.c.l.b16 %v1084
        %v1601 = vunpack.c.l.b16 %v1085
        %v1602 = vunpack.c.l.b16 %v1086
        %v1603 = vunpack.c.l.b16 %v1087
        %v1604 = vunpack.c.l.b16 %v1088
        %v1605 = vunpack.c.l.b16 %v1089
        %v1606 = vunpack.c.l.b16 %v1090
        %v1607 = vunpack.c.l.b16 %v1091
        %v1608 = vunpack.c.l.b16 %v1092
        %v1609 = vunpack.c.l.b16 %v1093
        %v1610 = vunpack.c.l.b16 %v1094
        %v1611 = vunpack.c.l.b16 %v1095
        %v1612 = vunpack.c.l.b16 %v1096
        %v1613 = vunpack.c.l.b16 %v1097
        %v1614 = vunpack.c.l.b16 %v1098
        %v1615 = vunpack.c.l.b16 %v1099
        %v1616 = vunpack.c.l.b16 %v1100
        %v1617 = vunpack.c.l.b16 %v1101
        %v1618 = vunpack.c.l.b16 %v1102
        %v1619 = vunpack.c.l.b16 %v1103
        %v1620 = vunpack.c.l.b16 %v1104
        %v1621 = vunpack.c.l.b16 %v1105
        %v1622 = vunpack.c.l.b16 %v1106
        %v1623 = vunpack.c.l.b16 %v1107
        %v1624 = vunpack.c.l.b16 %v1108
        %v1625 = vunpack.c.l.b16 %v1109
        %v1626 = vunpack.c.l.b16 %v1110
        %v1627 = vunpack.c.l.b16 %v1111
        %v1628 = vunpack.c.l.b16 %v1112
        %v1629 = vunpack.c.l.b16 %v1113
        %v1630 = vunpack.c.l.b16 %v1114
        %v1631 = vunpack.c.l.b16 %v1115
        %v1632 = vunpack.c.l.b16 %v1116
        %v1633 = vunpack.c.l.b16 %v1117
        %v1634 = vunpack.c.l.b16 %v1118
        %v1635 = vunpack.c.l.b16 %v1119
        %v1636 = vunpack.c.l.b16 %v1120
        %v1637 = vunpack.c.l.b16 %v1121
        %v1638 = vunpack.c.l.b16 %v1122
        %v1639 = vunpack.c.l.b16 %v1123
        %v1640 = vunpack.c.l.b16 %v1124
        %v1641 = vunpack.c.l.b16 %v1125
        %v1642 = vunpack.c.l.b16 %v1126
        %v1643 = vunpack.c.l.b16 %v1127
        %v1644 = vunpack.c.l.b16 %v1128
        %v1645 = vunpack.c.l.b16 %v1129
        %v1646 = vunpack.c.l.b16 %v1130
        %v1647 = vunpack.c.l.b16 %v1131
        %v1648 = vunpack.c.l.b16 %v1132
        %v1649 = vunpack.c.l.b16 %v1133
        %v1650 = vunpack.c.l.b16 %v1134
        %v1651 = vunpack.c.l.b16 %v1135
        %v1652 = vunpack.c.l.b16 %v1136
        %v1653 = vunpack.c.l.b16 %v1137
        %v1654 = vunpack.c.l.b16 %v1138
        %v1655 = vunpack.c.l.b16 %v1139
        %v1656 = vunpack.c.l.b16 %v1140
        %v1657 = vunpack.c.l.b16 %v1141
        %v1658 = vunpack.c.l.b16 %v1142
        %v1659 = vunpack.c.l.b16 %v1143
        %v1660 = vunpack.c.l.b16 %v1144
        %v1661 = vunpack.c.l.b16 %v1145
        %v1662 = vunpack.c.l.b16 %v1146
        %v1663 = vunpack.c.l.b16 %v1147
        %v1664 = vunpack.c.l.b16 %v1148
        %v1665 = vunpack.c.l.b16 %v1149
        %v1666 = vunpack.c.l.b16 %v1150
        %v1667 = vunpack.c.l.b16 %v1151
        %v1668 = vunpack.c.l.b16 %v1152
        %v1669 = vunpack.c.l.b16 %v1153
        %v1670 = vunpack.c.l.b16 %v1154
        %v1671 = vunpack.c.l.b16 %v1155
        %v1672 = vunpack.c.l.b16 %v1156
        %v1673 = vunpack.c.l.b16 %v1157
        %v1674 = vunpack.c.l.b16 %v1158
        %v1675 = vunpack.c.l.b16 %v1159
        %v1676 = vunpack.c.l.b16 %v1160
        %v1677 = vunpack.c.l.b16 %v1161
        %v1678 = vunpack.c.l.b16 %v1162
        %v1679 = vunpack.c.l.b16 %v1163
        %v1680 = vunpack.c.l.b16 %v1164
        %v1681 = vunpack.c.l.b16 %v1165
        %v1682 = vunpack.c.l.b16 %v1166
        %v1683 = vunpack.c.l.b16 %v1167
        %v1684 = vunpack.c.l.b16 %v1168
        %v1685 = vunpack.c.l.b16 %v1169
        %v1686 = vunpack.c.l.b16 %v1170
        %v1687 = vunpack.c.l.b16 %v1171
        %v1688 = vunpack.c.l.b16 %v1172
        %v1689 = vunpack.c.l.b16 %v1173
        %v1690 = vunpack.c.l.b16 %v1174
        %v1691 = vunpack.c.l.b16 %v1175
        %v1692 = vunpack.c.l.b16 %v1176
        %v1693 = vunpack.c.l.b16 %v1177
        %v1694 = vunpack.c.l.b16 %v1178
        %v1695 = vunpack.c.l.b16 %v1179
        %v1696 = vunpack.c.l.b16 %v1180
        %v1697 = vunpack.c.l.b16 %v1181
        %v1698 = vunpack.c.l.b16 %v1182
        %v1699 = vunpack.c.l.b16 %v1183
        %v1700 = vunpack.c.l.b16 %v1184
        %v1701 = vunpack.c.l.b16 %v1185
        %v1702 = vunpack.c.l.b16 %v1186
        %v1703 = vunpack.c.l.b16 %v1187
        %v1704 = vunpack.c.l.b16 %v1188
        %v1705 = vunpack.c.l.b16 %v1189
        %v1706 = vunpack.c.l.b16 %v1190
        %v1707 = vunpack.c.l.b16 %v1191
        %v1708 = vunpack.c.l.b16 %v1192
        %v1709 = vunpack.c.l.b16 %v1193
        %v1710 = vunpack.c.l.b16 %v1194
        %v1711 = vunpack.c.l.b16 %v1195
        %v1712 = vunpack.c.l.b16 %v1196
        %v1713 = vunpack.c.l.b16 %v1197
        %v1714 = vunpack.c.l.b16 %v1198
        %v1715 = vunpack.c.l.b16 %v1199
        %v1716 = vunpack.c.l.b16 %v1200
        %v1717 = vunpack.c.l.b16 %v1201
        %v1718 = vunpack.c.l.b16 %v1202
        %v1719 = vunpack.c.l.b16 %v1203
        %v1720 = vunpack.c.l.b16 %v1204
        %v1721 = vunpack.c.l.b16 %v1205
        %v1722 = vunpack.c.l.b16 %v1206
        %v1723 = vunpack.c.l.b16 %v1207
        %v1724 = vunpack.c.l.b16 %v1208
        %v1725 = vunpack.c.l.b16 %v1209
        %v1726 = vunpack.c.l.b16 %v1210
        %v1727 = vunpack.c.l.b16 %v1211
        %v1728 = vunpack.c.l.b16 %v1212
        %v1729 = vunpack.c.l.b16 %v1213
        %v1730 = vunpack.c.l.b16 %v1214
        %v1731 = vunpack.c.l.b16 %v1215
        %v1732 = vunpack.c.l.b16 %v1216
        %v1733 = vunpack.c.l.b16 %v1217
        %v1734 = vunpack.c.l.b16 %v1218
        %v1735 = vunpack.c.l.b16 %v1219
        %v1736 = vunpack.c.l.b16 %v1220
        %v1737 = vunpack.c.l.b16 %v1221
        %v1738 = vunpack.c.l.b16 %v1222
        %v1739 = vunpack.c.l.b16 %v1223
        %v1740 = vunpack.c.l.b16 %v1224
        %v1741 = vunpack.c.l.b16 %v1225
        %v1742 = vunpack.c.l.b16 %v1226
        %v1743 = vunpack.c.l.b16 %v1227
        %v1744 = vunpack.c.l.b16 %v1228
        %v1745 = vunpack.c.l.b16 %v1229
        %v1746 = vpack.c.b16 %v1491, %v1490
        %v1747 = vpack.c.b16 %v1493, %v1492
        %v1748 = vpack.c.b16 %v1495, %v1494
        %v1749 = vpack.c.b16 %v1497, %v1496
        %v1750 = vpack.c.b16 %v1499, %v1498
        %v1751 = vpack.c.b16 %v1501, %v1500
        %v1752 = vpack.c.b16 %v1503, %v1502
        %v1753 = vpack.c.b16 %v1505, %v1504
        %v1754 = vpack.c.b16 %v1507, %v1506
        %v1755 = vpack.c.b16 %v1509, %v1508
        %v1756 = vpack.c.b16 %v1511, %v1510
        %v1757 = vpack.c.b16 %v1513, %v1512
        %v1758 = vpack.c.b16 %v1515, %v1514
        %v1759 = vpack.c.b16 %v1517, %v1516
        %v1760 = vpack.c.b16 %v1519, %v1518
        %v1761 = vpack.c.b16 %v1521, %v1520
        %v1762 = vpack.c.b16 %v1523, %v1522
        %v1763 = vpack.c.b16 %v1525, %v1524
        %v1764 = vpack.c.b16 %v1527, %v1526
        %v1765 = vpack.c.b16 %v1529, %v1528
        %v1766 = vpack.c.b16 %v1531, %v1530
        %v1767 = vpack.c.b16 %v1533, %v1532
        %v1768 = vpack.c.b16 %v1535, %v1534
        %v1769 = vpack.c.b16 %v1537, %v1536
        %v1770 = vpack.c.b16 %v1539, %v1538
        %v1771 = vpack.c.b16 %v1541, %v1540
        %v1772 = vpack.c.b16 %v1543, %v1542
        %v1773 = vpack.c.b16 %v1545, %v1544
        %v1774 = vpack.c.b16 %v1547, %v1546
        %v1775 = vpack.c.b16 %v1549, %v1548
        %v1776 = vpack.c.b16 %v1551, %v1550
        %v1777 = vpack.c.b16 %v1553, %v1552
        %v1778 = vpack.c.b16 %v1555, %v1554
        %v1779 = vpack.c.b16 %v1557, %v1556
        %v1780 = vpack.c.b16 %v1559, %v1558
        %v1781 = vpack.c.b16 %v1561, %v1560
        %v1782 = vpack.c.b16 %v1563, %v1562
        %v1783 = vpack.c.b16 %v1565, %v1564
        %v1784 = vpack.c.b16 %v1567, %v1566
        %v1785 = vpack.c.b16 %v1569, %v1568
        %v1786 = vpack.c.b16 %v1571, %v1570
        %v1787 = vpack.c.b16 %v1573, %v1572
        %v1788 = vpack.c.b16 %v1575, %v1574
        %v1789 = vpack.c.b16 %v1577, %v1576
        %v1790 = vpack.c.b16 %v1579, %v1578
        %v1791 = vpack.c.b16 %v1581, %v1580
        %v1792 = vpack.c.b16 %v1583, %v1582
        %v1793 = vpack.c.b16 %v1585, %v1584
        %v1794 = vpack.c.b16 %v1587, %v1586
        %v1795 = vpack.c.b16 %v1589, %v1588
        %v1796 = vpack.c.b16 %v1591, %v1590
        %v1797 = vpack.c.b16 %v1593, %v1592
        %v1798 = vpack.c.b16 %v1595, %v1594
        %v1799 = vpack.c.b16 %v1597, %v1596
        %v1800 = vpack.c.b16 %v1599, %v1598
        %v1801 = vpack.c.b16 %v1601, %v1600
        %v1802 = vpack.c.b16 %v1603, %v1602
        %v1803 = vpack.c.b16 %v1605, %v1604
        %v1804 = vpack.c.b16 %v1607, %v1606
        %v1805 = vpack.c.b16 %v1609, %v1608
        %v1806 = vpack.c.b16 %v1611, %v1610
        %v1807 = vpack.c.b16 %v1613, %v1612
        %v1808 = vpack.c.b16 %v1615, %v1614
        %v1809 = vpack.c.b16 %v1617, %v1616
        %v1810 = vpack.c.b16 %v1619, %v1618
        %v1811 = vpack.c.b16 %v1621, %v1620
        %v1812 = vpack.c.b16 %v1623, %v1622
        %v1813 = vpack.c.b16 %v1625, %v1624
        %v1814 = vpack.c.b16 %v1627, %v1626
        %v1815 = vpack.c.b16 %v1629, %v1628
        %v1816 = vpack.c.b16 %v1631, %v1630
        %v1817 = vpack.c.b16 %v1633, %v1632
        %v1818 = vpack.c.b16 %v1635, %v1634
        %v1819 = vpack.c.b16 %v1637, %v1636
        %v1820 = vpack.c.b16 %v1639, %v1638
        %v1821 = vpack.c.b16 %v1641, %v1640
        %v1822 = vpack.c.b16 %v1643, %v1642
        %v1823 = vpack.c.b16 %v1645, %v1644
        %v1824 = vpack.c.b16 %v1647, %v1646
        %v1825 = vpack.c.b16 %v1649, %v1648
        %v1826 = vpack.c.b16 %v1651, %v1650
        %v1827 = vpack.c.b16 %v1653, %v1652
        %v1828 = vpack.c.b16 %v1655, %v1654
        %v1829 = vpack.c.b16 %v1657, %v1656
        %v1830 = vpack.c.b16 %v1659, %v1658
        %v1831 = vpack.c.b16 %v1661, %v1660
        %v1832 = vpack.c.b16 %v1663, %v1662
        %v1833 = vpack.c.b16 %v1665, %v1664
        %v1834 = vpack.c.b16 %v1667, %v1666
        %v1835 = vpack.c.b16 %v1669, %v1668
        %v1836 = vpack.c.b16 %v1671, %v1670
        %v1837 = vpack.c.b16 %v1673, %v1672
        %v1838 = vpack.c.b16 %v1675, %v1674
        %v1839 = vpack.c.b16 %v1677, %v1676
        %v1840 = vpack.c.b16 %v1679, %v1678
        %v1841 = vpack.c.b16 %v1681, %v1680
        %v1842 = vpack.c.b16 %v1683, %v1682
        %v1843 = vpack.c.b16 %v1685, %v1684
        %v1844 = vpack.c.b16 %v1687, %v1686
        %v1845 = vpack.c.b16 %v1689, %v1688
        %v1846 = vpack.c.b16 %v1691, %v1690
        %v1847 = vpack.c.b16 %v1693, %v1692
        %v1848 = vpack.c.b16 %v1695, %v1694
        %v1849 = vpack.c.b16 %v1697, %v1696
        %v1850 = vpack.c.b16 %v1699, %v1698
        %v1851 = vpack.c.b16 %v1701, %v1700
        %v1852 = vpack.c.b16 %v1703, %v1702
        %v1853 = vpack.c.b16 %v1705, %v1704
        %v1854 = vpack.c.b16 %v1707, %v1706
        %v1855 = vpack.c.b16 %v1709, %v1708
        %v1856 = vpack.c.b16 %v1711, %v1710
        %v1857 = vpack.c.b16 %v1713, %v1712
        %v1858 = vpack.c.b16 %v1715, %v1714
        %v1859 = vpack.c.b16 %v1717, %v1716
        %v1860 = vpack.c.b16 %v1719, %v1718
        %v1861 = vpack.c.b16 %v1721, %v1720
        %v1862 = vpack.c.b16 %v1723, %v1722
        %v1863 = vpack.c.b16 %v1725, %v1724
        %v1864 = vpack.c.b16 %v1727, %v1726
        %v1865 = vpack.c.b16 %v1729, %v1728
        %v1866 = vpack.c.b16 %v1731, %v1730
        %v1867 = vpack.c.b16 %v1733, %v1732
        %v1868 = vpack.c.b16 %v1735, %v1734
        %v1869 = vpack.c.b16 %v1737, %v1736
        %v1870 = vpack.c.b16 %v1739, %v1738
        %v1871 = vpack.c.b16 %v1741, %v1740
        %v1872 = vpack.c.b16 %v1743, %v1742
        %v1873 = vpack.c.b16 %v1745, %v1744
        %2002 = vmatpush.bf16.msra.mxu0 %v1753
        %2003 = vmatpush.bf16.msra.mxu0 %v1752
        %2004 = vmatpush.bf16.msra.mxu0 %v1751
        %2005 = vmatpush.bf16.msra.mxu0 %v1750
        %2006 = vmatpush.bf16.msra.mxu0 %v1749
        %2007 = vmatpush.bf16.msra.mxu0 %v1748
        %2008 = vmatpush.bf16.msra.mxu0 %v1747
        %2009 = vmatpush.bf16.msra.mxu0 %v1746
        %2010 = vmatmul.bf16.gmra.mxu0 %v958
        %v2011 = vpop.f32.mrf.mxu0
        %v2012 = vadd.f32 %v1232, %v2011
        %v2013 = vpop.f32.mrf.mxu0
        %2014 = vdwg.mxu0
        %2015 = vmatpush.bf16.msra.mxu0 %v1761
        %2016 = vmatpush.bf16.msra.mxu0 %v1760
        %2017 = vmatpush.bf16.msra.mxu0 %v1759
        %2018 = vmatpush.bf16.msra.mxu0 %v1758
        %2019 = vmatpush.bf16.msra.mxu0 %v1757
        %2020 = vmatpush.bf16.msra.mxu0 %v1756
        %2021 = vmatpush.bf16.msra.mxu0 %v1755
        %2022 = vmatpush.bf16.msra.mxu0 %v1754
        %2023 = vmatmul.bf16.gmra.mxu0 %v959
        %v2024 = vpop.f32.mrf.mxu0
        %v2025 = vadd.f32 %v2012, %v2024
        %v2026 = vpop.f32.mrf.mxu0
        %2027 = vdwg.mxu0
        %2028 = vmatpush.bf16.msra.mxu0 %v1769
        %2029 = vmatpush.bf16.msra.mxu0 %v1768
        %2030 = vmatpush.bf16.msra.mxu0 %v1767
        %2031 = vmatpush.bf16.msra.mxu0 %v1766
        %2032 = vmatpush.bf16.msra.mxu0 %v1765
        %2033 = vmatpush.bf16.msra.mxu0 %v1764
        %2034 = vmatpush.bf16.msra.mxu0 %v1763
        %2035 = vmatpush.bf16.msra.mxu0 %v1762
        %2036 = vmatmul.bf16.gmra.mxu0 %v960
        %v2037 = vpop.f32.mrf.mxu0
        %v2038 = vadd.f32 %v2025, %v2037
        %v2039 = vpop.f32.mrf.mxu0
        %2040 = vdwg.mxu0
        %2041 = vmatpush.bf16.msra.mxu0 %v1777
        %2042 = vmatpush.bf16.msra.mxu0 %v1776
        %2043 = vmatpush.bf16.msra.mxu0 %v1775
        %2044 = vmatpush.bf16.msra.mxu0 %v1774
        %2045 = vmatpush.bf16.msra.mxu0 %v1773
        %2046 = vmatpush.bf16.msra.mxu0 %v1772
        %2047 = vmatpush.bf16.msra.mxu0 %v1771
        %2048 = vmatpush.bf16.msra.mxu0 %v1770
        %2049 = vmatmul.bf16.gmra.mxu0 %v961
        %v2050 = vpop.f32.mrf.mxu0
        %v2051 = vadd.f32 %v2038, %v2050
        %v2052 = vpop.f32.mrf.mxu0
        %2053 = vdwg.mxu0
        %2054 = vmatpush.bf16.msra.mxu0 %v1785
        %2055 = vmatpush.bf16.msra.mxu0 %v1784
        %2056 = vmatpush.bf16.msra.mxu0 %v1783
        %2057 = vmatpush.bf16.msra.mxu0 %v1782
        %2058 = vmatpush.bf16.msra.mxu0 %v1781
        %2059 = vmatpush.bf16.msra.mxu0 %v1780
        %2060 = vmatpush.bf16.msra.mxu0 %v1779
        %2061 = vmatpush.bf16.msra.mxu0 %v1778
        %2062 = vmatmul.bf16.gmra.mxu0 %v962
        %v2063 = vpop.f32.mrf.mxu0
        %v2064 = vadd.f32 %v2051, %v2063
        %v2065 = vpop.f32.mrf.mxu0
        %2066 = vdwg.mxu0
        %2067 = vmatpush.bf16.msra.mxu0 %v1793
        %2068 = vmatpush.bf16.msra.mxu0 %v1792
        %2069 = vmatpush.bf16.msra.mxu0 %v1791
        %2070 = vmatpush.bf16.msra.mxu0 %v1790
        %2071 = vmatpush.bf16.msra.mxu0 %v1789
        %2072 = vmatpush.bf16.msra.mxu0 %v1788
        %2073 = vmatpush.bf16.msra.mxu0 %v1787
        %2074 = vmatpush.bf16.msra.mxu0 %v1786
        %2075 = vmatmul.bf16.gmra.mxu0 %v963
        %v2076 = vpop.f32.mrf.mxu0
        %v2077 = vadd.f32 %v2064, %v2076
        %v2078 = vpop.f32.mrf.mxu0
        %2079 = vdwg.mxu0
        %2080 = vmatpush.bf16.msra.mxu0 %v1801
        %2081 = vmatpush.bf16.msra.mxu0 %v1800
        %2082 = vmatpush.bf16.msra.mxu0 %v1799
        %2083 = vmatpush.bf16.msra.mxu0 %v1798
        %2084 = vmatpush.bf16.msra.mxu0 %v1797
        %2085 = vmatpush.bf16.msra.mxu0 %v1796
        %2086 = vmatpush.bf16.msra.mxu0 %v1795
        %2087 = vmatpush.bf16.msra.mxu0 %v1794
        %2088 = vmatmul.bf16.gmra.mxu0 %v964
        %v2089 = vpop.f32.mrf.mxu0
        %v2090 = vadd.f32 %v2077, %v2089
        %v2091 = vpop.f32.mrf.mxu0
        %2092 = vdwg.mxu0
        %2093 = vmatpush.bf16.msra.mxu0 %v1809
        %2094 = vmatpush.bf16.msra.mxu0 %v1808
        %2095 = vmatpush.bf16.msra.mxu0 %v1807
        %2096 = vmatpush.bf16.msra.mxu0 %v1806
        %2097 = vmatpush.bf16.msra.mxu0 %v1805
        %2098 = vmatpush.bf16.msra.mxu0 %v1804
        %2099 = vmatpush.bf16.msra.mxu0 %v1803
        %2100 = vmatpush.bf16.msra.mxu0 %v1802
        %2101 = vmatmul.bf16.gmra.mxu0 %v965
        %v2102 = vpop.f32.mrf.mxu0
        %v2103 = vadd.f32 %v2090, %v2102
        %v2104 = vpop.f32.mrf.mxu0
        %2105 = vdwg.mxu0
        %2106 = vmatpush.bf16.msra.mxu0 %v1817
        %2107 = vmatpush.bf16.msra.mxu0 %v1816
        %2108 = vmatpush.bf16.msra.mxu0 %v1815
        %2109 = vmatpush.bf16.msra.mxu0 %v1814
        %2110 = vmatpush.bf16.msra.mxu0 %v1813
        %2111 = vmatpush.bf16.msra.mxu0 %v1812
        %2112 = vmatpush.bf16.msra.mxu0 %v1811
        %2113 = vmatpush.bf16.msra.mxu0 %v1810
        %2114 = vmatmul.bf16.gmra.mxu0 %v966
        %v2115 = vpop.f32.mrf.mxu0
        %v2116 = vadd.f32 %v2103, %v2115
        %v2117 = vpop.f32.mrf.mxu0
        %2118 = vdwg.mxu0
        %2119 = vmatpush.bf16.msra.mxu0 %v1825
        %2120 = vmatpush.bf16.msra.mxu0 %v1824
        %2121 = vmatpush.bf16.msra.mxu0 %v1823
        %2122 = vmatpush.bf16.msra.mxu0 %v1822
        %2123 = vmatpush.bf16.msra.mxu0 %v1821
        %2124 = vmatpush.bf16.msra.mxu0 %v1820
        %2125 = vmatpush.bf16.msra.mxu0 %v1819
        %2126 = vmatpush.bf16.msra.mxu0 %v1818
        %2127 = vmatmul.bf16.gmra.mxu0 %v967
        %v2128 = vpop.f32.mrf.mxu0
        %v2129 = vadd.f32 %v2116, %v2128
        %v2130 = vpop.f32.mrf.mxu0
        %2131 = vdwg.mxu0
        %2132 = vmatpush.bf16.msra.mxu0 %v1833
        %2133 = vmatpush.bf16.msra.mxu0 %v1832
        %2134 = vmatpush.bf16.msra.mxu0 %v1831
        %2135 = vmatpush.bf16.msra.mxu0 %v1830
        %2136 = vmatpush.bf16.msra.mxu0 %v1829
        %2137 = vmatpush.bf16.msra.mxu0 %v1828
        %2138 = vmatpush.bf16.msra.mxu0 %v1827
        %2139 = vmatpush.bf16.msra.mxu0 %v1826
        %2140 = vmatmul.bf16.gmra.mxu0 %v968
        %v2141 = vpop.f32.mrf.mxu0
        %v2142 = vadd.f32 %v2129, %v2141
        %v2143 = vpop.f32.mrf.mxu0
        %2144 = vdwg.mxu0
        %2145 = vmatpush.bf16.msra.mxu0 %v1841
        %2146 = vmatpush.bf16.msra.mxu0 %v1840
        %2147 = vmatpush.bf16.msra.mxu0 %v1839
        %2148 = vmatpush.bf16.msra.mxu0 %v1838
        %2149 = vmatpush.bf16.msra.mxu0 %v1837
        %2150 = vmatpush.bf16.msra.mxu0 %v1836
        %2151 = vmatpush.bf16.msra.mxu0 %v1835
        %2152 = vmatpush.bf16.msra.mxu0 %v1834
        %2153 = vmatmul.bf16.gmra.mxu0 %v969
        %v2154 = vpop.f32.mrf.mxu0
        %v2155 = vadd.f32 %v2142, %v2154
        %v2156 = vpop.f32.mrf.mxu0
        %2157 = vdwg.mxu0
        %2158 = vmatpush.bf16.msra.mxu0 %v1849
        %2159 = vmatpush.bf16.msra.mxu0 %v1848
        %2160 = vmatpush.bf16.msra.mxu0 %v1847
        %2161 = vmatpush.bf16.msra.mxu0 %v1846
        %2162 = vmatpush.bf16.msra.mxu0 %v1845
        %2163 = vmatpush.bf16.msra.mxu0 %v1844
        %2164 = vmatpush.bf16.msra.mxu0 %v1843
        %2165 = vmatpush.bf16.msra.mxu0 %v1842
        %2166 = vmatmul.bf16.gmra.mxu0 %v970
        %v2167 = vpop.f32.mrf.mxu0
        %v2168 = vadd.f32 %v2155, %v2167
        %v2169 = vpop.f32.mrf.mxu0
        %2170 = vdwg.mxu0
        %2171 = vmatpush.bf16.msra.mxu0 %v1857
        %2172 = vmatpush.bf16.msra.mxu0 %v1856
        %2173 = vmatpush.bf16.msra.mxu0 %v1855
        %2174 = vmatpush.bf16.msra.mxu0 %v1854
        %2175 = vmatpush.bf16.msra.mxu0 %v1853
        %2176 = vmatpush.bf16.msra.mxu0 %v1852
        %2177 = vmatpush.bf16.msra.mxu0 %v1851
        %2178 = vmatpush.bf16.msra.mxu0 %v1850
        %2179 = vmatmul.bf16.gmra.mxu0 %v971
        %v2180 = vpop.f32.mrf.mxu0
        %v2181 = vadd.f32 %v2168, %v2180
        %v2182 = vpop.f32.mrf.mxu0
        %2183 = vdwg.mxu0
        %2184 = vmatpush.bf16.msra.mxu0 %v1865
        %2185 = vmatpush.bf16.msra.mxu0 %v1864
        %2186 = vmatpush.bf16.msra.mxu0 %v1863
        %2187 = vmatpush.bf16.msra.mxu0 %v1862
        %2188 = vmatpush.bf16.msra.mxu0 %v1861
        %2189 = vmatpush.bf16.msra.mxu0 %v1860
        %2190 = vmatpush.bf16.msra.mxu0 %v1859
        %2191 = vmatpush.bf16.msra.mxu0 %v1858
        %2192 = vmatmul.bf16.gmra.mxu0 %v972
        %v2193 = vpop.f32.mrf.mxu0
        %v2194 = vadd.f32 %v2181, %v2193
        %v2195 = vpop.f32.mrf.mxu0
        %2196 = vdwg.mxu0
        %2197 = vmatpush.bf16.msra.mxu0 %v1873
        %2198 = vmatpush.bf16.msra.mxu0 %v1872
        %2199 = vmatpush.bf16.msra.mxu0 %v1871
        %2200 = vmatpush.bf16.msra.mxu0 %v1870
        %2201 = vmatpush.bf16.msra.mxu0 %v1869
        %2202 = vmatpush.bf16.msra.mxu0 %v1868
        %2203 = vmatpush.bf16.msra.mxu0 %v1867
        %2204 = vmatpush.bf16.msra.mxu0 %v1866
        %2205 = vmatmul.bf16.gmra.mxu0 %v973
        %v2206 = vpop.f32.mrf.mxu0
        %v2207 = vadd.f32 %v2194, %v2206
        %v2208 = vpop.f32.mrf.mxu0
        %2209 = vdwg.mxu0
        %v2210 = vpack.c.bf16 %v2207, %v2207
        %v2211 = vld [vmem:[%s5] sm:$0xf]
        %v2212 = vld [vmem:[%s5 + $0x4] sm:$0xf]
        %v2213 = vld [vmem:[%s5 + $0x8] sm:$0xf]
        %v2214 = vld [vmem:[%s5 + $0xc] sm:$0xf]
        %v2215 = vld [vmem:[%s5 + $0x10] sm:$0xf]
        %v2216 = vld [vmem:[%s5 + $0x14] sm:$0xf]
        %v2217 = vld [vmem:[%s5 + $0x18] sm:$0xf]
        %v2218 = vld [vmem:[%s5 + $0x1c] sm:$0xf]
        %v2219 = vld [vmem:[%s5 + $0x20] sm:$0xf]
        %v2220 = vld [vmem:[%s5 + $0x24] sm:$0xf]
        %v2221 = vld [vmem:[%s5 + $0x28] sm:$0xf]
        %v2222 = vld [vmem:[%s5 + $0x2c] sm:$0xf]
        %v2223 = vld [vmem:[%s5 + $0x30] sm:$0xf]
        %v2224 = vld [vmem:[%s5 + $0x34] sm:$0xf]
        %v2225 = vld [vmem:[%s5 + $0x38] sm:$0xf]
        %v2226 = vld [vmem:[%s5 + $0x3c] sm:$0xf]
        %v2227 = vld [vmem:[%s6] sm:$0x1]
        %v2229 = vperm.slane %v2227, 0
        %v2247 = vunpack.c.l.b16 %v2211
        %v2248 = vunpack.c.l.b16 %v2212
        %v2249 = vunpack.c.l.b16 %v2213
        %v2250 = vunpack.c.l.b16 %v2214
        %v2251 = vunpack.c.l.b16 %v2215
        %v2252 = vunpack.c.l.b16 %v2216
        %v2253 = vunpack.c.l.b16 %v2217
        %v2254 = vunpack.c.l.b16 %v2218
        %v2255 = vunpack.c.l.b16 %v2219
        %v2256 = vunpack.c.l.b16 %v2220
        %v2257 = vunpack.c.l.b16 %v2221
        %v2258 = vunpack.c.l.b16 %v2222
        %v2259 = vunpack.c.l.b16 %v2223
        %v2260 = vunpack.c.l.b16 %v2224
        %v2261 = vunpack.c.l.b16 %v2225
        %v2262 = vunpack.c.l.b16 %v2226
        %v2263 = vpack.c.b16 %v2248, %v2247
        %v2264 = vpack.c.b16 %v2250, %v2249
        %v2265 = vpack.c.b16 %v2252, %v2251
        %v2266 = vpack.c.b16 %v2254, %v2253
        %v2267 = vpack.c.b16 %v2256, %v2255
        %v2268 = vpack.c.b16 %v2258, %v2257
        %v2269 = vpack.c.b16 %v2260, %v2259
        %v2270 = vpack.c.b16 %v2262, %v2261
        %2279 = vmatpush.bf16.msra.mxu0 %v2270
        %2280 = vmatpush.bf16.msra.mxu0 %v2269
        %2281 = vmatpush.bf16.msra.mxu0 %v2268
        %2282 = vmatpush.bf16.msra.mxu0 %v2267
        %2283 = vmatpush.bf16.msra.mxu0 %v2266
        %2284 = vmatpush.bf16.msra.mxu0 %v2265
        %2285 = vmatpush.bf16.msra.mxu0 %v2264
        %2286 = vmatpush.bf16.msra.mxu0 %v2263
        %2287 = vmatmul.bf16.gmra.mxu0 %v2210
        %v2288 = vpop.f32.mrf.mxu0
        %v2289 = vadd.f32 %v2229, %v2288
        %v2290 = vpop.f32.mrf.mxu0
        %2291 = vdwg.mxu0
        %v2292 = vpack.c.bf16 %v2289, %v2289
        %v2293 = vld [vmem:[%s7] sm:$0xf]
        %v2294 = vld [vmem:[%s7 + $0x4] sm:$0xf]
        %v2295 = vld [vmem:[%s7 + $0x8] sm:$0xf]
        %v2296 = vld [vmem:[%s7 + $0xc] sm:$0xf]
        %v2297 = vld [vmem:[%s7 + $0x10] sm:$0xf]
        %v2298 = vld [vmem:[%s7 + $0x14] sm:$0xf]
        %v2299 = vld [vmem:[%s7 + $0x18] sm:$0xf]
        %v2300 = vld [vmem:[%s7 + $0x1c] sm:$0xf]
        %v2301 = vld [vmem:[%s7 + $0x20] sm:$0xf]
        %v2302 = vld [vmem:[%s7 + $0x24] sm:$0xf]
        %v2303 = vld [vmem:[%s7 + $0x28] sm:$0xf]
        %v2304 = vld [vmem:[%s7 + $0x2c] sm:$0xf]
        %v2305 = vld [vmem:[%s7 + $0x30] sm:$0xf]
        %v2306 = vld [vmem:[%s7 + $0x34] sm:$0xf]
        %v2307 = vld [vmem:[%s7 + $0x38] sm:$0xf]
        %v2308 = vld [vmem:[%s7 + $0x3c] sm:$0xf]
        %v2309 = vld [vmem:[%s8] sm:$0x1]
        %v2311 = vperm.slane %v2309, 0
        %v2329 = vunpack.c.l.b16 %v2293
        %v2330 = vunpack.c.l.b16 %v2294
        %v2331 = vunpack.c.l.b16 %v2295
        %v2332 = vunpack.c.l.b16 %v2296
        %v2333 = vunpack.c.l.b16 %v2297
        %v2334 = vunpack.c.l.b16 %v2298
        %v2335 = vunpack.c.l.b16 %v2299
        %v2336 = vunpack.c.l.b16 %v2300
        %v2337 = vunpack.c.l.b16 %v2301
        %v2338 = vunpack.c.l.b16 %v2302
        %v2339 = vunpack.c.l.b16 %v2303
        %v2340 = vunpack.c.l.b16 %v2304
        %v2341 = vunpack.c.l.b16 %v2305
        %v2342 = vunpack.c.l.b16 %v2306
        %v2343 = vunpack.c.l.b16 %v2307
        %v2344 = vunpack.c.l.b16 %v2308
        %v2345 = vpack.c.b16 %v2330, %v2329
        %v2346 = vpack.c.b16 %v2332, %v2331
        %v2347 = vpack.c.b16 %v2334, %v2333
        %v2348 = vpack.c.b16 %v2336, %v2335
        %v2349 = vpack.c.b16 %v2338, %v2337
        %v2350 = vpack.c.b16 %v2340, %v2339
        %v2351 = vpack.c.b16 %v2342, %v2341
        %v2352 = vpack.c.b16 %v2344, %v2343
        %2361 = vmatpush.bf16.msra.mxu0 %v2352
        %2362 = vmatpush.bf16.msra.mxu0 %v2351
        %2363 = vmatpush.bf16.msra.mxu0 %v2350
        %2364 = vmatpush.bf16.msra.mxu0 %v2349
        %2365 = vmatpush.bf16.msra.mxu0 %v2348
        %2366 = vmatpush.bf16.msra.mxu0 %v2347
        %2367 = vmatpush.bf16.msra.mxu0 %v2346
        %2368 = vmatpush.bf16.msra.mxu0 %v2345
        %2369 = vmatmul.bf16.gmra.mxu0 %v2292
        %v2370 = vpop.f32.mrf.mxu0
        %v2371 = vadd.f32 %v2311, %v2370
        %v2372 = vpop.f32.mrf.mxu0
        %2373 = vdwg.mxu0
        %v2374 = vld [vmem:[%s9] sm:$0x1]
        %v2376 = vperm.slane %v2374, 0
        %v2378 = vmul.f32 %v2371, %v2376
        %2379 = vadd.xlane.f32.xlu0 %v2378
        %v2380 = vpop.xlane.xlu0 %2379
        %v2381 = vld [vmem:[#allocation2] sm:$0x1]
        %v2383 = vperm.slane %v2381, 0
        %v2385 = vadd.f32 %v2380, %v2383
        %v2386 = vsub.f32 0.0, %v2385
        %v2387 = vmul.f32 %v2386, 1.442695
        %v2388 = vpow.pop %v2387
        %v2389 = vadd.f32 %v2388, 1.0
        %v2390 = vrcp.pop %v2389
        %v2391 = vmul.f32 %v2389, %v2390
        %v2392 = vsub.f32 1.0, %v2391
        %v2393 = vmul.f32 %v2390, %v2392
        %v2394 = vadd.f32 %v2390, %v2393
        %vm2395 = vweird.f32 %v2389
        %vm2396 = vweird.f32 %v2390
        %vm2397 = vmor %vm2395, %vm2396
        %v2398 = vsel %vm2397, %v2390, %v2394
        %v2399 = vand.u32 2147483647, %v2389
        %vm2400 = vcmp.eq.f32.partialorder %v2399, 8.507059e+37
        %v2401 = vand.u32 %v2389, 2147483648
        %v2402 = vor.u32 1.1754944e-38, %v2401
        %v2403 = vsel %vm2400, %v2402, %v2398
        %v2404 = vmul.f32 1.0, %v2403
        %vm2405 = vcmask 7168
        %2406 = vst.msk [vmem:[%s417] sm:$0xff] %vm2405, %v2404
        %p2407 = scmp.lt.s32.totalorder %s26, 1
        %s2408 = scalar_select %p2407, %s26, 1
        %s2409 = smul.addr %s2408, 8
        %s2410 = scalar_lea.vmem %s11, %s2409
        // Predicated region
        $region73: #{fused_forward.1} parent=63 // pred_check
          %p2411 = pneg %p280
        $region74: #{fused_forward.1} parent=63 // pred_check_branch
          %2413 = sbr.rel (%p2411) target = $region76
        $region75: #{fused_forward.1} parent=63 // pred_region
          _
        $region76: #{fused_forward.1} parent=63 // pred_fallthru
          _
      $region64: #{fused_forward.1} parent=5 // pred_fallthru
        _
      %p2414 = scmp.le.s32.totalorder 2, %s21
      // Predicated region
      $region77: #{fused_forward.1} parent=5 // pred_check
        %p2415 = pneg %p2414
      $region78: #{fused_forward.1} parent=5 // pred_check_branch
        %2417 = sbr.rel (%p2415) target = $region80
      $region79: #{fused_forward.1} parent=5 // pred_region
        %s2418 = ssub.s32 %s21, 2
        // Predicated region
        $region81: #{fused_forward.1} parent=79 // pred_check
          %p2419 = pneg %p286
        $region82: #{fused_forward.1} parent=79 // pred_check_branch
          %2421 = sbr.rel (%p2419) target = $region84
        $region83: #{fused_forward.1} parent=79 // pred_region
          %p2422 = scmp.lt.s32.totalorder %s27, 1
          %s2423 = scalar_select %p2422, %s27, 1
          %s2424 = smul.addr %s2423, 8
          %s2425 = scalar_lea.vmem %s11, %s2424
        $region84: #{fused_forward.1} parent=79 // pred_fallthru
          _
      $region80: #{fused_forward.1} parent=5 // pred_fallthru
        _
    $region6: #{fused_forward.1} parent=1 // loop_footer
      %s25 = sadd.s32 1, %s21
    $region7: #{fused_forward.1} parent=1 // loop_footer_branch
      %20 = sbr.rel target = $region3
    $region8: #{fused_forward.1} parent=1 // loop_exit
      _
    %2426 = vsyncpa [#allocation4], 1
    %s2427 = scalar_lea.sflag [#allocation4], 1
    %2428 = vsyncpa %s2427, 1
    %2429 = vsyncpa [#allocation6], 1

</llo_original>
